<compile_context>
chip_gen: v7x
topology: tpu7x:2x2x1
jax: 0.10.0
libtpu: 0.0.40
codegen_flags: <defaults>
</compile_context>

<pallas_src>
import functools

import jax
import jax.numpy as jnp
import numpy as np
from jax.experimental import pallas as pl
from jax.experimental.pallas import tpu as pltpu


def rnn_fused_kernel(tok_ref, emb_ref, w_ih_ref, w_hh_ref, b_ref,
                     w_fc_hbm_ref, b_fc_ref, out_ref,
                     w_fc_vmem, fc_sem, *, B, S):
    """Fused single-invocation SimpleRNN forward.

    tok_ref     : (B, S)    int32 token ids in SMEM
    emb_ref     : (VOCAB,E) embedding table in VMEM
    w_ih_ref    : (E, H)    W_ih^T in VMEM
    w_hh_ref    : (H, H)    W_hh^T in VMEM
    b_ref       : (1, H)    b_ih + b_hh (pre-combined in the wrapper)
    w_fc_hbm_ref: (H, V)    W_fc^T, raw HBM ref (DMA'd manually)
    b_fc_ref    : (1, V)
    out_ref     : (B*S, V)  batch-major logits (row = b*S + t)
    w_fc_vmem   : (H, V)    VMEM landing buffer for W_fc^T
    fc_sem      : ()        DMA completion semaphore for the W_fc copy
    """
    H = w_hh_ref.shape[0]

    # Kick off the W_fc HBM->VMEM copy now; it is not needed until after the
    # recurrence, so the DMA engine runs it under the serial compute.
    fc_cp = pltpu.make_async_copy(w_fc_hbm_ref, w_fc_vmem, fc_sem)
    fc_cp.start()

    # ---- Fused embedding gather (time-major row order: row = t*B + b) ------
    x_rows = []
    for t in range(S):
        for b in range(B):
            tok = tok_ref[b, t]                               # scalar from SMEM
            x_rows.append(emb_ref[pl.ds(tok, 1), :])          # (1, E) dyn. row load
    x = jnp.concatenate(x_rows, axis=0)                       # (S*B, E)

    # ---- Hoisted batched input projection (one MXU pass, bias folded in) ---
    pre_x = (jnp.dot(x, w_ih_ref[...],
                     preferred_element_type=jnp.float32)
             + b_ref[...])                                    # (S*B, H)

    # ---- Serial tanh recurrence (S static, fully unrolled; h_t in vregs) ---
    h = jnp.zeros((B, H), jnp.float32)                        # PyTorch default h0 = 0
    h_steps = []
    for t in range(S):
        pre_t = pre_x[t * B:(t + 1) * B, :]                   # static sublane slice
        h = jnp.tanh(pre_t + jnp.dot(h, w_hh_ref[...],
                                     preferred_element_type=jnp.float32))
        h_steps.append(h)

    # ---- In-register batch-major reorder (row = b*S + t) -------------------
    # Static slice + concat = compile-time sublane shuffle; no scratch, no
    # masked stores, no VMEM round trip.
    hs = jnp.concatenate(
        [h_steps[t][b:b + 1, :] for b in range(B) for t in range(S)],
        axis=0)                                               # (B*S, H)

    # ---- Batched fc projection + single lane-dense full-block store --------
    fc_cp.wait()
    logits = (jnp.dot(hs, w_fc_vmem[...],
                      preferred_element_type=jnp.float32)
              + b_fc_ref[...])                                # (B*S, V)
    out_ref[...] = logits.astype(out_ref.dtype)


def simple_rnn_forward(tokens, emb_table, w_ih, w_hh, b_ih, b_hh, w_fc, b_fc):
    B, S = tokens.shape
    E = emb_table.shape[1]
    H = w_hh.shape[0]
    V = w_fc.shape[1]

    # Pre-combine the two RNN biases (saves a broadcast+add per timestep).
    b_comb = (b_ih + b_hh).reshape(1, H)

    vmem = pltpu.MemorySpace.VMEM
    smem = pltpu.MemorySpace.SMEM
    logits = pl.pallas_call(
        functools.partial(rnn_fused_kernel, B=B, S=S),
        out_shape=jax.ShapeDtypeStruct((B * S, V), jnp.float32),
        # No grid: weights (~550 KiB) + activations easily fit VMEM on every
        # TPU generation (including v7x's 64 MiB per-TC), so a single
        # invocation avoids all per-step pipeline overhead.
        in_specs=[
            pl.BlockSpec(memory_space=smem),    # tokens    (B, S) int32
            pl.BlockSpec(memory_space=vmem),    # emb_table (VOCAB, E)
            pl.BlockSpec(memory_space=vmem),    # W_ih^T    (E, H)
            pl.BlockSpec(memory_space=vmem),    # W_hh^T    (H, H)
            pl.BlockSpec(memory_space=vmem),    # b_ih+b_hh (1, H)
            pl.BlockSpec(memory_space=pl.ANY),  # W_fc^T    (H, V) stays in HBM
            pl.BlockSpec(memory_space=vmem),    # b_fc      (1, V)
        ],
        out_specs=pl.BlockSpec(memory_space=vmem),
        scratch_shapes=[
            pltpu.VMEM((H, V), jnp.float32),    # W_fc landing buffer
            pltpu.SemaphoreType.DMA(()),        # its DMA completion semaphore
        ],
    )(tokens, emb_table, w_ih, w_hh, b_comb, w_fc, b_fc)

    # Already batch-major (row = b*S + t) == PyTorch output.view(-1, H) -> fc.
    return logits


def reference_forward(tokens, emb_table, w_ih, w_hh, b_ih, b_hh, w_fc, b_fc):
    B, S = tokens.shape
    H = w_hh.shape[0]
    x = emb_table[tokens]                            # (B, S, E)

    def step(h, x_t):
        h_new = jnp.tanh(x_t @ w_ih + b_ih[0] + h @ w_hh + b_hh[0])
        return h_new, h_new

    _, hs = jax.lax.scan(step, jnp.zeros((B, H), jnp.float32),
                         jnp.transpose(x, (1, 0, 2)))
    hs = jnp.transpose(hs, (1, 0, 2)).reshape(B * S, H)
    return hs @ w_fc + b_fc[0]


if __name__ == "__main__":
    # Small shapes consistent with the module (embedding_dim=128, hidden=256).
    B, S = 2, 8
    VOCAB, E, H = 128, 128, 256

    key = jax.random.PRNGKey(0)
    k_tok, k_emb, k_wih, k_whh, k_bih, k_bhh, k_wfc, k_bfc = jax.random.split(key, 8)

    tokens = jax.random.randint(k_tok, (B, S), 0, VOCAB, dtype=jnp.int32)

    # PyTorch shapes: W_ih (H,E), W_hh (H,H), fc weight (V,H); we store the
    # transposed versions used by the kernel.
    emb_table = jax.random.normal(k_emb, (VOCAB, E), jnp.float32) * 0.1
    w_ih = jax.random.normal(k_wih, (E, H), jnp.float32) * 0.05
    w_hh = jax.random.normal(k_whh, (H, H), jnp.float32) * 0.05
    b_ih = jax.random.normal(k_bih, (1, H), jnp.float32) * 0.05
    b_hh = jax.random.normal(k_bhh, (1, H), jnp.float32) * 0.05
    w_fc = jax.random.normal(k_wfc, (H, VOCAB), jnp.float32) * 0.05
    b_fc = jax.random.normal(k_bfc, (1, VOCAB), jnp.float32) * 0.05

    logits = simple_rnn_forward(tokens, emb_table, w_ih, w_hh, b_ih, b_hh, w_fc, b_fc)
    logits = jax.block_until_ready(logits)

    ref = reference_forward(tokens, emb_table, w_ih, w_hh, b_ih, b_hh, w_fc, b_fc)
    ref = jax.block_until_ready(ref)

    assert logits.shape == (B * S, VOCAB)
    assert np.allclose(np.asarray(logits), np.asarray(ref), atol=1e-4, rtol=1e-4)

    print("KERNEL_OK")
</pallas_src>

<mosaic_0001>
module attributes {stable_mosaic.version = 11 : i64} {
  func.func @rnn_fused_kernel(%arg0: memref<2x8xi32, #tpu.memory_space<smem>>, %arg1: memref<128x128xf32, #tpu.memory_space<vmem>>, %arg2: memref<128x256xf32, #tpu.memory_space<vmem>>, %arg3: memref<256x256xf32, #tpu.memory_space<vmem>>, %arg4: memref<1x256xf32, #tpu.memory_space<vmem>>, %arg5: memref<256x128xf32, #tpu.memory_space<any>>, %arg6: memref<1x128xf32, #tpu.memory_space<vmem>>, %arg7: memref<16x128xf32, #tpu.memory_space<vmem>>, %arg8: memref<256x128xf32, #tpu.memory_space<vmem>>, %arg9: memref<!tpu.dma_semaphore, #tpu.memory_space<semaphore_mem>>) attributes {dimension_semantics = [], scalar_prefetch = 0 : i64, scratch_operands = 2 : i64, tpu.core_type = #tpu.core_type<tc>} {
    tpu.enqueue_dma source(%arg5 : memref<256x128xf32, #tpu.memory_space<any>>) target(%arg8 : memref<256x128xf32, #tpu.memory_space<vmem>>) target_semaphore(%arg9 : memref<!tpu.dma_semaphore, #tpu.memory_space<semaphore_mem>>)
    %c0 = arith.constant 0 : index
    %c0_0 = arith.constant 0 : index
    %0 = memref.load %arg0[%c0, %c0_0] : memref<2x8xi32, #tpu.memory_space<smem>>
    %1 = arith.index_cast %0 : i32 to index
    %c0_1 = arith.constant 0 : index
    %2 = vector.load %arg1[%1, %c0_1] : memref<128x128xf32, #tpu.memory_space<vmem>>, vector<1x128xf32>
    %c1 = arith.constant 1 : index
    %c0_2 = arith.constant 0 : index
    %3 = memref.load %arg0[%c1, %c0_2] : memref<2x8xi32, #tpu.memory_space<smem>>
    %4 = arith.index_cast %3 : i32 to index
    %c0_3 = arith.constant 0 : index
    %5 = vector.load %arg1[%4, %c0_3] : memref<128x128xf32, #tpu.memory_space<vmem>>, vector<1x128xf32>
    %c0_4 = arith.constant 0 : index
    %c1_5 = arith.constant 1 : index
    %6 = memref.load %arg0[%c0_4, %c1_5] : memref<2x8xi32, #tpu.memory_space<smem>>
    %7 = arith.index_cast %6 : i32 to index
    %c0_6 = arith.constant 0 : index
    %8 = vector.load %arg1[%7, %c0_6] : memref<128x128xf32, #tpu.memory_space<vmem>>, vector<1x128xf32>
    %c1_7 = arith.constant 1 : index
    %c1_8 = arith.constant 1 : index
    %9 = memref.load %arg0[%c1_7, %c1_8] : memref<2x8xi32, #tpu.memory_space<smem>>
    %10 = arith.index_cast %9 : i32 to index
    %c0_9 = arith.constant 0 : index
    %11 = vector.load %arg1[%10, %c0_9] : memref<128x128xf32, #tpu.memory_space<vmem>>, vector<1x128xf32>
    %c0_10 = arith.constant 0 : index
    %c2 = arith.constant 2 : index
    %12 = memref.load %arg0[%c0_10, %c2] : memref<2x8xi32, #tpu.memory_space<smem>>
    %13 = arith.index_cast %12 : i32 to index
    %c0_11 = arith.constant 0 : index
    %14 = vector.load %arg1[%13, %c0_11] : memref<128x128xf32, #tpu.memory_space<vmem>>, vector<1x128xf32>
    %c1_12 = arith.constant 1 : index
    %c2_13 = arith.constant 2 : index
    %15 = memref.load %arg0[%c1_12, %c2_13] : memref<2x8xi32, #tpu.memory_space<smem>>
    %16 = arith.index_cast %15 : i32 to index
    %c0_14 = arith.constant 0 : index
    %17 = vector.load %arg1[%16, %c0_14] : memref<128x128xf32, #tpu.memory_space<vmem>>, vector<1x128xf32>
    %c0_15 = arith.constant 0 : index
    %c3 = arith.constant 3 : index
    %18 = memref.load %arg0[%c0_15, %c3] : memref<2x8xi32, #tpu.memory_space<smem>>
    %19 = arith.index_cast %18 : i32 to index
    %c0_16 = arith.constant 0 : index
    %20 = vector.load %arg1[%19, %c0_16] : memref<128x128xf32, #tpu.memory_space<vmem>>, vector<1x128xf32>
    %c1_17 = arith.constant 1 : index
    %c3_18 = arith.constant 3 : index
    %21 = memref.load %arg0[%c1_17, %c3_18] : memref<2x8xi32, #tpu.memory_space<smem>>
    %22 = arith.index_cast %21 : i32 to index
    %c0_19 = arith.constant 0 : index
    %23 = vector.load %arg1[%22, %c0_19] : memref<128x128xf32, #tpu.memory_space<vmem>>, vector<1x128xf32>
    %c0_20 = arith.constant 0 : index
    %c4 = arith.constant 4 : index
    %24 = memref.load %arg0[%c0_20, %c4] : memref<2x8xi32, #tpu.memory_space<smem>>
    %25 = arith.index_cast %24 : i32 to index
    %c0_21 = arith.constant 0 : index
    %26 = vector.load %arg1[%25, %c0_21] : memref<128x128xf32, #tpu.memory_space<vmem>>, vector<1x128xf32>
    %c1_22 = arith.constant 1 : index
    %c4_23 = arith.constant 4 : index
    %27 = memref.load %arg0[%c1_22, %c4_23] : memref<2x8xi32, #tpu.memory_space<smem>>
    %28 = arith.index_cast %27 : i32 to index
    %c0_24 = arith.constant 0 : index
    %29 = vector.load %arg1[%28, %c0_24] : memref<128x128xf32, #tpu.memory_space<vmem>>, vector<1x128xf32>
    %c0_25 = arith.constant 0 : index
    %c5 = arith.constant 5 : index
    %30 = memref.load %arg0[%c0_25, %c5] : memref<2x8xi32, #tpu.memory_space<smem>>
    %31 = arith.index_cast %30 : i32 to index
    %c0_26 = arith.constant 0 : index
    %32 = vector.load %arg1[%31, %c0_26] : memref<128x128xf32, #tpu.memory_space<vmem>>, vector<1x128xf32>
    %c1_27 = arith.constant 1 : index
    %c5_28 = arith.constant 5 : index
    %33 = memref.load %arg0[%c1_27, %c5_28] : memref<2x8xi32, #tpu.memory_space<smem>>
    %34 = arith.index_cast %33 : i32 to index
    %c0_29 = arith.constant 0 : index
    %35 = vector.load %arg1[%34, %c0_29] : memref<128x128xf32, #tpu.memory_space<vmem>>, vector<1x128xf32>
    %c0_30 = arith.constant 0 : index
    %c6 = arith.constant 6 : index
    %36 = memref.load %arg0[%c0_30, %c6] : memref<2x8xi32, #tpu.memory_space<smem>>
    %37 = arith.index_cast %36 : i32 to index
    %c0_31 = arith.constant 0 : index
    %38 = vector.load %arg1[%37, %c0_31] : memref<128x128xf32, #tpu.memory_space<vmem>>, vector<1x128xf32>
    %c1_32 = arith.constant 1 : index
    %c6_33 = arith.constant 6 : index
    %39 = memref.load %arg0[%c1_32, %c6_33] : memref<2x8xi32, #tpu.memory_space<smem>>
    %40 = arith.index_cast %39 : i32 to index
    %c0_34 = arith.constant 0 : index
    %41 = vector.load %arg1[%40, %c0_34] : memref<128x128xf32, #tpu.memory_space<vmem>>, vector<1x128xf32>
    %c0_35 = arith.constant 0 : index
    %c7 = arith.constant 7 : index
    %42 = memref.load %arg0[%c0_35, %c7] : memref<2x8xi32, #tpu.memory_space<smem>>
    %43 = arith.index_cast %42 : i32 to index
    %c0_36 = arith.constant 0 : index
    %44 = vector.load %arg1[%43, %c0_36] : memref<128x128xf32, #tpu.memory_space<vmem>>, vector<1x128xf32>
    %c1_37 = arith.constant 1 : index
    %c7_38 = arith.constant 7 : index
    %45 = memref.load %arg0[%c1_37, %c7_38] : memref<2x8xi32, #tpu.memory_space<smem>>
    %46 = arith.index_cast %45 : i32 to index
    %c0_39 = arith.constant 0 : index
    %47 = vector.load %arg1[%46, %c0_39] : memref<128x128xf32, #tpu.memory_space<vmem>>, vector<1x128xf32>
    %48 = tpu.concatenate %2, %5, %8, %11, %14, %17, %20, %23, %26, %29, %32, %35, %38, %41, %44, %47 in 0 : vector<1x128xf32>, vector<1x128xf32>, vector<1x128xf32>, vector<1x128xf32>, vector<1x128xf32>, vector<1x128xf32>, vector<1x128xf32>, vector<1x128xf32>, vector<1x128xf32>, vector<1x128xf32>, vector<1x128xf32>, vector<1x128xf32>, vector<1x128xf32>, vector<1x128xf32>, vector<1x128xf32>, vector<1x128xf32> -> vector<16x128xf32>
    %c0_40 = arith.constant 0 : index
    %c0_41 = arith.constant 0 : index
    %49 = vector.load %arg2[%c0_40, %c0_41] : memref<128x256xf32, #tpu.memory_space<vmem>>, vector<128x256xf32>
    %cst = arith.constant dense<0.000000e+00> : vector<16x256xf32>
    %50 = tpu.matmul %48, %49, %cst {dimension_numbers = #tpu.dot_dimension_numbers<[1], [0], [0], [1], [0, 0, 1, 1], [], []>} : vector<16x128xf32>, vector<128x256xf32>, vector<16x256xf32> -> vector<16x256xf32>
    %c0_42 = arith.constant 0 : index
    %c0_43 = arith.constant 0 : index
    %51 = vector.load %arg4[%c0_42, %c0_43] : memref<1x256xf32, #tpu.memory_space<vmem>>, vector<1x256xf32>
    %52 = vector.broadcast %51 : vector<1x256xf32> to vector<16x256xf32>
    %53 = arith.addf %50, %52 : vector<16x256xf32>
    %cst_44 = arith.constant 0.000000e+00 : f32
    %54 = vector.broadcast %cst_44 : f32 to vector<2x256xf32>
    %55 = vector.extract_strided_slice %53 {offsets = [0, 0], sizes = [2, 256], strides = [1, 1]} : vector<16x256xf32> to vector<2x256xf32>
    %c0_45 = arith.constant 0 : index
    %c0_46 = arith.constant 0 : index
    %56 = vector.load %arg3[%c0_45, %c0_46] : memref<256x256xf32, #tpu.memory_space<vmem>>, vector<256x256xf32>
    %cst_47 = arith.constant dense<0.000000e+00> : vector<2x256xf32>
    %57 = tpu.matmul %54, %56, %cst_47 {dimension_numbers = #tpu.dot_dimension_numbers<[1], [0], [0], [1], [0, 0, 1, 1], [], []>} : vector<2x256xf32>, vector<256x256xf32>, vector<2x256xf32> -> vector<2x256xf32>
    %58 = arith.addf %55, %57 : vector<2x256xf32>
    %59 = math.tanh %58 : vector<2x256xf32>
    %60 = vector.extract_strided_slice %53 {offsets = [2, 0], sizes = [2, 256], strides = [1, 1]} : vector<16x256xf32> to vector<2x256xf32>
    %c0_48 = arith.constant 0 : index
    %c0_49 = arith.constant 0 : index
    %61 = vector.load %arg3[%c0_48, %c0_49] : memref<256x256xf32, #tpu.memory_space<vmem>>, vector<256x256xf32>
    %cst_50 = arith.constant dense<0.000000e+00> : vector<2x256xf32>
    %62 = tpu.matmul %59, %61, %cst_50 {dimension_numbers = #tpu.dot_dimension_numbers<[1], [0], [0], [1], [0, 0, 1, 1], [], []>} : vector<2x256xf32>, vector<256x256xf32>, vector<2x256xf32> -> vector<2x256xf32>
    %63 = arith.addf %60, %62 : vector<2x256xf32>
    %64 = math.tanh %63 : vector<2x256xf32>
    %65 = vector.extract_strided_slice %53 {offsets = [4, 0], sizes = [2, 256], strides = [1, 1]} : vector<16x256xf32> to vector<2x256xf32>
    %c0_51 = arith.constant 0 : index
    %c0_52 = arith.constant 0 : index
    %66 = vector.load %arg3[%c0_51, %c0_52] : memref<256x256xf32, #tpu.memory_space<vmem>>, vector<256x256xf32>
    %cst_53 = arith.constant dense<0.000000e+00> : vector<2x256xf32>
    %67 = tpu.matmul %64, %66, %cst_53 {dimension_numbers = #tpu.dot_dimension_numbers<[1], [0], [0], [1], [0, 0, 1, 1], [], []>} : vector<2x256xf32>, vector<256x256xf32>, vector<2x256xf32> -> vector<2x256xf32>
    %68 = arith.addf %65, %67 : vector<2x256xf32>
    %69 = math.tanh %68 : vector<2x256xf32>
    %70 = vector.extract_strided_slice %53 {offsets = [6, 0], sizes = [2, 256], strides = [1, 1]} : vector<16x256xf32> to vector<2x256xf32>
    %c0_54 = arith.constant 0 : index
    %c0_55 = arith.constant 0 : index
    %71 = vector.load %arg3[%c0_54, %c0_55] : memref<256x256xf32, #tpu.memory_space<vmem>>, vector<256x256xf32>
    %cst_56 = arith.constant dense<0.000000e+00> : vector<2x256xf32>
    %72 = tpu.matmul %69, %71, %cst_56 {dimension_numbers = #tpu.dot_dimension_numbers<[1], [0], [0], [1], [0, 0, 1, 1], [], []>} : vector<2x256xf32>, vector<256x256xf32>, vector<2x256xf32> -> vector<2x256xf32>
    %73 = arith.addf %70, %72 : vector<2x256xf32>
    %74 = math.tanh %73 : vector<2x256xf32>
    %75 = vector.extract_strided_slice %53 {offsets = [8, 0], sizes = [2, 256], strides = [1, 1]} : vector<16x256xf32> to vector<2x256xf32>
    %c0_57 = arith.constant 0 : index
    %c0_58 = arith.constant 0 : index
    %76 = vector.load %arg3[%c0_57, %c0_58] : memref<256x256xf32, #tpu.memory_space<vmem>>, vector<256x256xf32>
    %cst_59 = arith.constant dense<0.000000e+00> : vector<2x256xf32>
    %77 = tpu.matmul %74, %76, %cst_59 {dimension_numbers = #tpu.dot_dimension_numbers<[1], [0], [0], [1], [0, 0, 1, 1], [], []>} : vector<2x256xf32>, vector<256x256xf32>, vector<2x256xf32> -> vector<2x256xf32>
    %78 = arith.addf %75, %77 : vector<2x256xf32>
    %79 = math.tanh %78 : vector<2x256xf32>
    %80 = vector.extract_strided_slice %53 {offsets = [10, 0], sizes = [2, 256], strides = [1, 1]} : vector<16x256xf32> to vector<2x256xf32>
    %c0_60 = arith.constant 0 : index
    %c0_61 = arith.constant 0 : index
    %81 = vector.load %arg3[%c0_60, %c0_61] : memref<256x256xf32, #tpu.memory_space<vmem>>, vector<256x256xf32>
    %cst_62 = arith.constant dense<0.000000e+00> : vector<2x256xf32>
    %82 = tpu.matmul %79, %81, %cst_62 {dimension_numbers = #tpu.dot_dimension_numbers<[1], [0], [0], [1], [0, 0, 1, 1], [], []>} : vector<2x256xf32>, vector<256x256xf32>, vector<2x256xf32> -> vector<2x256xf32>
    %83 = arith.addf %80, %82 : vector<2x256xf32>
    %84 = math.tanh %83 : vector<2x256xf32>
    %85 = vector.extract_strided_slice %53 {offsets = [12, 0], sizes = [2, 256], strides = [1, 1]} : vector<16x256xf32> to vector<2x256xf32>
    %c0_63 = arith.constant 0 : index
    %c0_64 = arith.constant 0 : index
    %86 = vector.load %arg3[%c0_63, %c0_64] : memref<256x256xf32, #tpu.memory_space<vmem>>, vector<256x256xf32>
    %cst_65 = arith.constant dense<0.000000e+00> : vector<2x256xf32>
    %87 = tpu.matmul %84, %86, %cst_65 {dimension_numbers = #tpu.dot_dimension_numbers<[1], [0], [0], [1], [0, 0, 1, 1], [], []>} : vector<2x256xf32>, vector<256x256xf32>, vector<2x256xf32> -> vector<2x256xf32>
    %88 = arith.addf %85, %87 : vector<2x256xf32>
    %89 = math.tanh %88 : vector<2x256xf32>
    %90 = vector.extract_strided_slice %53 {offsets = [14, 0], sizes = [2, 256], strides = [1, 1]} : vector<16x256xf32> to vector<2x256xf32>
    %c0_66 = arith.constant 0 : index
    %c0_67 = arith.constant 0 : index
    %91 = vector.load %arg3[%c0_66, %c0_67] : memref<256x256xf32, #tpu.memory_space<vmem>>, vector<256x256xf32>
    %cst_68 = arith.constant dense<0.000000e+00> : vector<2x256xf32>
    %92 = tpu.matmul %89, %91, %cst_68 {dimension_numbers = #tpu.dot_dimension_numbers<[1], [0], [0], [1], [0, 0, 1, 1], [], []>} : vector<2x256xf32>, vector<256x256xf32>, vector<2x256xf32> -> vector<2x256xf32>
    %93 = arith.addf %90, %92 : vector<2x256xf32>
    %94 = math.tanh %93 : vector<2x256xf32>
    %95 = vector.extract_strided_slice %59 {offsets = [0, 0], sizes = [1, 256], strides = [1, 1]} : vector<2x256xf32> to vector<1x256xf32>
    %96 = vector.extract_strided_slice %64 {offsets = [0, 0], sizes = [1, 256], strides = [1, 1]} : vector<2x256xf32> to vector<1x256xf32>
    %97 = vector.extract_strided_slice %69 {offsets = [0, 0], sizes = [1, 256], strides = [1, 1]} : vector<2x256xf32> to vector<1x256xf32>
    %98 = vector.extract_strided_slice %74 {offsets = [0, 0], sizes = [1, 256], strides = [1, 1]} : vector<2x256xf32> to vector<1x256xf32>
    %99 = vector.extract_strided_slice %79 {offsets = [0, 0], sizes = [1, 256], strides = [1, 1]} : vector<2x256xf32> to vector<1x256xf32>
    %100 = vector.extract_strided_slice %84 {offsets = [0, 0], sizes = [1, 256], strides = [1, 1]} : vector<2x256xf32> to vector<1x256xf32>
    %101 = vector.extract_strided_slice %89 {offsets = [0, 0], sizes = [1, 256], strides = [1, 1]} : vector<2x256xf32> to vector<1x256xf32>
    %102 = vector.extract_strided_slice %94 {offsets = [0, 0], sizes = [1, 256], strides = [1, 1]} : vector<2x256xf32> to vector<1x256xf32>
    %103 = vector.extract_strided_slice %59 {offsets = [1, 0], sizes = [1, 256], strides = [1, 1]} : vector<2x256xf32> to vector<1x256xf32>
    %104 = vector.extract_strided_slice %64 {offsets = [1, 0], sizes = [1, 256], strides = [1, 1]} : vector<2x256xf32> to vector<1x256xf32>
    %105 = vector.extract_strided_slice %69 {offsets = [1, 0], sizes = [1, 256], strides = [1, 1]} : vector<2x256xf32> to vector<1x256xf32>
    %106 = vector.extract_strided_slice %74 {offsets = [1, 0], sizes = [1, 256], strides = [1, 1]} : vector<2x256xf32> to vector<1x256xf32>
    %107 = vector.extract_strided_slice %79 {offsets = [1, 0], sizes = [1, 256], strides = [1, 1]} : vector<2x256xf32> to vector<1x256xf32>
    %108 = vector.extract_strided_slice %84 {offsets = [1, 0], sizes = [1, 256], strides = [1, 1]} : vector<2x256xf32> to vector<1x256xf32>
    %109 = vector.extract_strided_slice %89 {offsets = [1, 0], sizes = [1, 256], strides = [1, 1]} : vector<2x256xf32> to vector<1x256xf32>
    %110 = vector.extract_strided_slice %94 {offsets = [1, 0], sizes = [1, 256], strides = [1, 1]} : vector<2x256xf32> to vector<1x256xf32>
    %111 = tpu.concatenate %95, %96, %97, %98, %99, %100, %101, %102, %103, %104, %105, %106, %107, %108, %109, %110 in 0 : vector<1x256xf32>, vector<1x256xf32>, vector<1x256xf32>, vector<1x256xf32>, vector<1x256xf32>, vector<1x256xf32>, vector<1x256xf32>, vector<1x256xf32>, vector<1x256xf32>, vector<1x256xf32>, vector<1x256xf32>, vector<1x256xf32>, vector<1x256xf32>, vector<1x256xf32>, vector<1x256xf32>, vector<1x256xf32> -> vector<16x256xf32>
    tpu.wait_dma2 semaphore(%arg9 : memref<!tpu.dma_semaphore, #tpu.memory_space<semaphore_mem>>) src(%arg5 : memref<256x128xf32, #tpu.memory_space<any>>) dst(%arg8 : memref<256x128xf32, #tpu.memory_space<vmem>>)
    %c0_69 = arith.constant 0 : index
    %c0_70 = arith.constant 0 : index
    %112 = vector.load %arg8[%c0_69, %c0_70] : memref<256x128xf32, #tpu.memory_space<vmem>>, vector<256x128xf32>
    %cst_71 = arith.constant dense<0.000000e+00> : vector<16x128xf32>
    %113 = tpu.matmul %111, %112, %cst_71 {dimension_numbers = #tpu.dot_dimension_numbers<[1], [0], [0], [1], [0, 0, 1, 1], [], []>} : vector<16x256xf32>, vector<256x128xf32>, vector<16x128xf32> -> vector<16x128xf32>
    %c0_72 = arith.constant 0 : index
    %c0_73 = arith.constant 0 : index
    %114 = vector.load %arg6[%c0_72, %c0_73] : memref<1x128xf32, #tpu.memory_space<vmem>>, vector<1x128xf32>
    %115 = vector.broadcast %114 : vector<1x128xf32> to vector<16x128xf32>
    %116 = arith.addf %113, %115 : vector<16x128xf32>
    %c0_74 = arith.constant 0 : index
    %c0_75 = arith.constant 0 : index
    %117 = vector.load %arg7[%c0_74, %c0_75] : memref<16x128xf32, #tpu.memory_space<vmem>>, vector<16x128xf32>
    tpu.vector_store %arg7[%c0_74, %c0_75], %116 {strides = array<i32>} : memref<16x128xf32, #tpu.memory_space<vmem>>, vector<16x128xf32>,
    return
  }
}

</mosaic_0001>

<llo_original>
// kernel: tpu_custom_call.1
$region0: #{tpu_custom_call.1}
  #allocation0 [shape = 'u32[]', space=smem, size = 0x4, offset = 0x4, fixed_abs, tag = 'smem constant byte address 0x4 - core index']
  #allocation1 [shape = 'u32[144,128]{1,0:T(1,128)}', space=vmem, size = 0x12000, scoped, tag = 'internal scratch']
  #allocation2 [shape = 'f32[256,128]{1,0:T(8,128)}', space=vmem, size = 0x20000, scoped, tag = 'scratch operand']
  #allocation3 [shape = 's32[1]{0}', space=sflag, size = 0x4, scoped, tag = 'scratch operand']
  #allocation13 [shape = 's32[]', space=sflag, size = 0x4, offset = 0, fixed_abs, tag = 'sflag constant byte address 0x0 - dummy sync flag']
  #allocation14 [shape = 's32[]', space=sflag, size = 0x4, offset = 0, fixed_abs, tag = 'sflag constant byte address 0x0 - dummy sync flag']
  #allocation15 [shape = 'u32[]', space=smem, size = 0x4, offset = 0x44, fixed_abs, tag = 'smem constant byte address 0x44 - assertion arg 0']
  #allocation16 [shape = 'u32[]', space=smem, size = 0x4, offset = 0x48, fixed_abs, tag = 'smem constant byte address 0x48 - assertion arg 1']
  %s0 = inlined_call_operand.hbm [shape: s32[2,8], index: 0, kind: input, shape index: {}]
  %s1 = inlined_call_operand.hbm [shape: f32[128,128], index: 1, kind: input, shape index: {}]
  %s2 = inlined_call_operand.hbm [shape: f32[128,256], index: 2, kind: input, shape index: {}]
  %s3 = inlined_call_operand.hbm [shape: f32[256,256], index: 3, kind: input, shape index: {}]
  %s4 = inlined_call_operand.vmem [shape: f32[1,256], index: 4, kind: input, shape index: {}]
  %s5 = inlined_call_operand.hbm [shape: f32[256,128], index: 5, kind: input, shape index: {}]
  %s6 = inlined_call_operand.vmem [shape: f32[1,128], index: 6, kind: input, shape index: {}]
  %s7 = inlined_call_operand.hbm [shape: f32[16,128], index: 7, kind: output, shape index: {}]
  %s8 = sld [smem:[#allocation0]]
  $region54: #{tpu_custom_call.1} parent=0
    _
  %s10 = ssub.s32 1, %s8
  %s11 = scalar_select 0, %s10, %s8
  $region1: #{tpu_custom_call.1} parent=0
    #allocation4 [shape = 'u8[1024]{0}', space=smem, size = 0x400, scoped, tag = 'input window, operand 0, single buffered']
    #allocation5 [shape = 's32[1]{0}', space=sflag, size = 0x4, scoped, tag = 'scoped memory for tpu_custom_call.1']
    #allocation6 [shape = 's32[1]{0}', space=sflag, size = 0x4, scoped, tag = 'scoped memory for tpu_custom_call.1']
    #allocation7 [shape = 's32[1]{0}', space=sflag, size = 0x4, scoped, tag = 'scoped memory for tpu_custom_call.1']
    #allocation8 [shape = 'u8[65536]{0}', space=vmem, size = 0x10000, scoped, tag = 'input window, operand 1, single buffered']
    #allocation9 [shape = 'u8[131072]{0}', space=vmem, size = 0x20000, scoped, tag = 'input window, operand 2, single buffered']
    #allocation10 [shape = 's32[1]{0}', space=sflag, size = 0x4, scoped, tag = 'scoped memory for tpu_custom_call.1']
    #allocation11 [shape = 'u8[262144]{0}', space=vmem, size = 0x40000, scoped, tag = 'input window, operand 3, single buffered']
    #allocation12 [shape = 'u8[8192]{0}', space=vmem, size = 0x2000, scoped, tag = 'output window, operand 0, single buffered']
    %12 = vsyncpa [#allocation7], 0
    %13 = vsyncpa [#allocation5], 0
    %14 = vsyncpa [#allocation10], 0
    %15 = vsyncpa [#allocation6], 0
    // Predicated region
    $region2: #{tpu_custom_call.1} parent=1 // pred_check
      _
    $region3: #{tpu_custom_call.1} parent=1 // pred_check_branch
      %17 = sbr.rel (0) target = $region5
    $region4: #{tpu_custom_call.1} parent=1 // pred_region
      %s19 = ssub.s32 32, 32
      %20 = vsyncadd [#allocation7], %s19
      %23 = dma.hbm_to_smem %s0, 32, [#allocation4], [#allocation7]
    $region5: #{tpu_custom_call.1} parent=1 // pred_fallthru
      _
    // Predicated region
    $region6: #{tpu_custom_call.1} parent=1 // pred_check
      _
    $region7: #{tpu_custom_call.1} parent=1 // pred_check_branch
      %25 = sbr.rel (0) target = $region9
    $region8: #{tpu_custom_call.1} parent=1 // pred_region
      %s27 = ssub.s32 2048, 2048
      %28 = vsyncadd [#allocation5], %s27
      %s29 = sshll.u32 [#allocation8], 4
      %s30 = int_to_ptr.vmem [resolvable:$true] %s29
      %35 = dma.hbm_to_vmem [thread:$0]  %s1, 2048, %s30, [#allocation5], 128, 128, 8
    $region9: #{tpu_custom_call.1} parent=1 // pred_fallthru
      _
    // Predicated region
    $region10: #{tpu_custom_call.1} parent=1 // pred_check
      _
    $region11: #{tpu_custom_call.1} parent=1 // pred_check_branch
      %37 = sbr.rel (0) target = $region13
    $region12: #{tpu_custom_call.1} parent=1 // pred_region
      %s39 = ssub.s32 4096, 4096
      %40 = vsyncadd [#allocation10], %s39
      %s41 = sshll.u32 [#allocation9], 4
      %s42 = int_to_ptr.vmem [resolvable:$true] %s41
      %47 = dma.hbm_to_vmem [thread:$0]  %s2, 4096, %s42, [#allocation10], 256, 256, 16
    $region13: #{tpu_custom_call.1} parent=1 // pred_fallthru
      _
    // Predicated region
    $region14: #{tpu_custom_call.1} parent=1 // pred_check
      _
    $region15: #{tpu_custom_call.1} parent=1 // pred_check_branch
      %49 = sbr.rel (0) target = $region17
    $region16: #{tpu_custom_call.1} parent=1 // pred_region
      %s51 = ssub.s32 8192, 8192
      %52 = vsyncadd [#allocation10], %s51
      %s53 = sshll.u32 [#allocation11], 4
      %s54 = int_to_ptr.vmem [resolvable:$true] %s53
      %59 = dma.hbm_to_vmem [thread:$0]  %s3, 8192, %s54, [#allocation10], 256, 256, 16
    $region17: #{tpu_custom_call.1} parent=1 // pred_fallthru
      _
    // Predicated region
    $region18: #{tpu_custom_call.1} parent=1 // pred_check
      _
    $region19: #{tpu_custom_call.1} parent=1 // pred_check_branch
      %61 = sbr.rel (0) target = $region21
    $region20: #{tpu_custom_call.1} parent=1 // pred_region
      _
    $region21: #{tpu_custom_call.1} parent=1 // pred_fallthru
      _
    // Predicated region
    $region22: #{tpu_custom_call.1} parent=1 // pred_check
      _
    $region23: #{tpu_custom_call.1} parent=1 // pred_check_branch
      %63 = sbr.rel (0) target = $region25
    $region24: #{tpu_custom_call.1} parent=1 // pred_region
      _
    $region25: #{tpu_custom_call.1} parent=1 // pred_fallthru
      _
    // Predicated region
    $region26: #{tpu_custom_call.1} parent=1 // pred_check
      _
    $region27: #{tpu_custom_call.1} parent=1 // pred_check_branch
      %65 = sbr.rel (0) target = $region29
    $region28: #{tpu_custom_call.1} parent=1 // pred_region
      %66 = dma.done [#allocation7], 32
    $region29: #{tpu_custom_call.1} parent=1 // pred_fallthru
      _
    // Predicated region
    $region30: #{tpu_custom_call.1} parent=1 // pred_check
      _
    $region31: #{tpu_custom_call.1} parent=1 // pred_check_branch
      %68 = sbr.rel (0) target = $region33
    $region32: #{tpu_custom_call.1} parent=1 // pred_region
      %69 = dma.done [#allocation5], 2048
    $region33: #{tpu_custom_call.1} parent=1 // pred_fallthru
      _
    // Predicated region
    $region34: #{tpu_custom_call.1} parent=1 // pred_check
      _
    $region35: #{tpu_custom_call.1} parent=1 // pred_check_branch
      %71 = sbr.rel (0) target = $region37
    $region36: #{tpu_custom_call.1} parent=1 // pred_region
      %72 = dma.done [#allocation10], 4096
    $region37: #{tpu_custom_call.1} parent=1 // pred_fallthru
      _
    // Predicated region
    $region38: #{tpu_custom_call.1} parent=1 // pred_check
      _
    $region39: #{tpu_custom_call.1} parent=1 // pred_check_branch
      %74 = sbr.rel (0) target = $region41
    $region40: #{tpu_custom_call.1} parent=1 // pred_region
      %75 = dma.done [#allocation10], 8192
    $region41: #{tpu_custom_call.1} parent=1 // pred_fallthru
      _
    %76 = sfence
    // Predicated region
    $region42: #{tpu_custom_call.1} parent=1 // pred_check
      _
    $region43: #{tpu_custom_call.1} parent=1 // pred_check_branch
      %78 = sbr.rel target = $region45
    $region44: #{tpu_custom_call.1} parent=1 // pred_region
      %79 = sst [smem:[#allocation15]] [#allocation14]
      %80 = sst [smem:[#allocation16]] [#allocation13]
    $region45: #{tpu_custom_call.1} parent=1 // pred_fallthru
      _
    %82 = shalt.err (0)
    %s84 = sshll.u32 [#allocation2], 4
    %s85 = int_to_ptr.vmem [resolvable:$true] %s84
    %87 = dma.hbm_to_vmem [thread:$0]  %s5, 4096, %s85, [#allocation3]
    %s88 = sld [smem:[#allocation4]]
    %s89 = scalar_lea.vmem [#allocation8], %s88
    %v90 = vld [vmem:[%s89] sm:$0x1]
    %s91 = sld [smem:[#allocation4 + $0x80]]
    %s92 = scalar_lea.vmem [#allocation8], %s91
    %v93 = vld [vmem:[%s92] sm:$0x1]
    %s94 = sld [smem:[#allocation4 + $0x1]]
    %s95 = scalar_lea.vmem [#allocation8], %s94
    %v96 = vld [vmem:[%s95] sm:$0x1]
    %s97 = sld [smem:[#allocation4 + $0x81]]
    %s98 = scalar_lea.vmem [#allocation8], %s97
    %v99 = vld [vmem:[%s98] sm:$0x1]
    %s100 = sld [smem:[#allocation4 + $0x2]]
    %s101 = scalar_lea.vmem [#allocation8], %s100
    %v102 = vld [vmem:[%s101] sm:$0x1]
    %s103 = sld [smem:[#allocation4 + $0x82]]
    %s104 = scalar_lea.vmem [#allocation8], %s103
    %v105 = vld [vmem:[%s104] sm:$0x1]
    %s106 = sld [smem:[#allocation4 + $0x3]]
    %s107 = scalar_lea.vmem [#allocation8], %s106
    %v108 = vld [vmem:[%s107] sm:$0x1]
    %s109 = sld [smem:[#allocation4 + $0x83]]
    %s110 = scalar_lea.vmem [#allocation8], %s109
    %v111 = vld [vmem:[%s110] sm:$0x1]
    %s112 = sld [smem:[#allocation4 + $0x4]]
    %s113 = scalar_lea.vmem [#allocation8], %s112
    %v114 = vld [vmem:[%s113] sm:$0x1]
    %s115 = sld [smem:[#allocation4 + $0x84]]
    %s116 = scalar_lea.vmem [#allocation8], %s115
    %v117 = vld [vmem:[%s116] sm:$0x1]
    %s118 = sld [smem:[#allocation4 + $0x5]]
    %s119 = scalar_lea.vmem [#allocation8], %s118
    %v120 = vld [vmem:[%s119] sm:$0x1]
    %s121 = sld [smem:[#allocation4 + $0x85]]
    %s122 = scalar_lea.vmem [#allocation8], %s121
    %v123 = vld [vmem:[%s122] sm:$0x1]
    %s124 = sld [smem:[#allocation4 + $0x6]]
    %s125 = scalar_lea.vmem [#allocation8], %s124
    %v126 = vld [vmem:[%s125] sm:$0x1]
    %s127 = sld [smem:[#allocation4 + $0x86]]
    %s128 = scalar_lea.vmem [#allocation8], %s127
    %v129 = vld [vmem:[%s128] sm:$0x1]
    %s130 = sld [smem:[#allocation4 + $0x7]]
    %s131 = scalar_lea.vmem [#allocation8], %s130
    %v132 = vld [vmem:[%s131] sm:$0x1]
    %s133 = sld [smem:[#allocation4 + $0x87]]
    %s134 = scalar_lea.vmem [#allocation8], %s133
    %v135 = vld [vmem:[%s134] sm:$0x1]
    %v137 = vrot.slane %v93, 7
    %v140 = vrot.slane %v96, 6
    %v143 = vrot.slane %v99, 5
    %v146 = vrot.slane %v102, 4
    %v149 = vrot.slane %v105, 3
    %v152 = vrot.slane %v108, 2
    %v155 = vrot.slane %v111, 1
    %v158 = vrot.slane %v117, 7
    %v161 = vrot.slane %v120, 6
    %v164 = vrot.slane %v123, 5
    %v167 = vrot.slane %v126, 4
    %v170 = vrot.slane %v129, 3
    %v173 = vrot.slane %v132, 2
    %v176 = vrot.slane %v135, 1
    %vm178 = vcmask 1040384
    %v179 = vsel %vm178, %v90, %v137
    %vm180 = vcmask 1041408
    %v181 = vsel %vm180, %v179, %v140
    %vm182 = vcmask 1042432
    %v183 = vsel %vm182, %v181, %v143
    %vm184 = vcmask 1043456
    %v185 = vsel %vm184, %v183, %v146
    %vm186 = vcmask 1044480
    %v187 = vsel %vm186, %v185, %v149
    %vm188 = vcmask 1045504
    %v189 = vsel %vm188, %v187, %v152
    %vm190 = vcmask 1046528
    %v191 = vsel %vm190, %v189, %v155
    %v192 = vsel %vm178, %v114, %v158
    %v193 = vsel %vm180, %v192, %v161
    %v194 = vsel %vm182, %v193, %v164
    %v195 = vsel %vm184, %v194, %v167
    %v196 = vsel %vm186, %v195, %v170
    %v197 = vsel %vm188, %v196, %v173
    %v198 = vsel %vm190, %v197, %v176
    %v199 = vld [vmem:[#allocation9] sm:$0xff]
    %v200 = vld [vmem:[#allocation9 + $0x8] sm:$0xff]
    %v201 = vld [vmem:[#allocation9 + $0x10] sm:$0xff]
    %v202 = vld [vmem:[#allocation9 + $0x18] sm:$0xff]
    %v203 = vld [vmem:[#allocation9 + $0x20] sm:$0xff]
    %v204 = vld [vmem:[#allocation9 + $0x28] sm:$0xff]
    %v205 = vld [vmem:[#allocation9 + $0x30] sm:$0xff]
    %v206 = vld [vmem:[#allocation9 + $0x38] sm:$0xff]
    %v207 = vld [vmem:[#allocation9 + $0x40] sm:$0xff]
    %v208 = vld [vmem:[#allocation9 + $0x48] sm:$0xff]
    %v209 = vld [vmem:[#allocation9 + $0x50] sm:$0xff]
    %v210 = vld [vmem:[#allocation9 + $0x58] sm:$0xff]
    %v211 = vld [vmem:[#allocation9 + $0x60] sm:$0xff]
    %v212 = vld [vmem:[#allocation9 + $0x68] sm:$0xff]
    %v213 = vld [vmem:[#allocation9 + $0x70] sm:$0xff]
    %v214 = vld [vmem:[#allocation9 + $0x78] sm:$0xff]
    %v215 = vld [vmem:[#allocation9 + $0x80] sm:$0xff]
    %v216 = vld [vmem:[#allocation9 + $0x88] sm:$0xff]
    %v217 = vld [vmem:[#allocation9 + $0x90] sm:$0xff]
    %v218 = vld [vmem:[#allocation9 + $0x98] sm:$0xff]
    %v219 = vld [vmem:[#allocation9 + $0xa0] sm:$0xff]
    %v220 = vld [vmem:[#allocation9 + $0xa8] sm:$0xff]
    %v221 = vld [vmem:[#allocation9 + $0xb0] sm:$0xff]
    %v222 = vld [vmem:[#allocation9 + $0xb8] sm:$0xff]
    %v223 = vld [vmem:[#allocation9 + $0xc0] sm:$0xff]
    %v224 = vld [vmem:[#allocation9 + $0xc8] sm:$0xff]
    %v225 = vld [vmem:[#allocation9 + $0xd0] sm:$0xff]
    %v226 = vld [vmem:[#allocation9 + $0xd8] sm:$0xff]
    %v227 = vld [vmem:[#allocation9 + $0xe0] sm:$0xff]
    %v228 = vld [vmem:[#allocation9 + $0xe8] sm:$0xff]
    %v229 = vld [vmem:[#allocation9 + $0xf0] sm:$0xff]
    %v230 = vld [vmem:[#allocation9 + $0xf8] sm:$0xff]
    %v231 = vld [vmem:[%s4] sm:$0x3]
    %v233 = vlaneseq
    %v234 = vshrl.u32 %v233, 7
    %v235 = vsub.s32 0, %v234
    %v236 = vrot.slane %v231, %v235
    %v237 = vlaneseq
    %v238 = vshrl.u32 %v237, 7
    %v239 = vsub.s32 1, %v238
    %v240 = vrot.slane %v231, %v239
    %243 = vmatprep.subr.mxu0 %v200
    %244 = vmatpush1.msra.mxu0 %v199
    %245 = vmatprep.subr.mxu0 %v202
    %246 = vmatpush1.msra.mxu0 %v201
    %247 = vmatprep.subr.mxu0 %v204
    %248 = vmatpush1.msra.mxu0 %v203
    %249 = vmatprep.subr.mxu0 %v206
    %250 = vmatpush1.msra.mxu0 %v205
    %251 = vmatprep.subr.mxu0 %v208
    %252 = vmatpush1.msra.mxu0 %v207
    %253 = vmatprep.subr.mxu0 %v210
    %254 = vmatpush1.msra.mxu0 %v209
    %255 = vmatprep.subr.mxu0 %v212
    %256 = vmatpush1.msra.mxu0 %v211
    %257 = vmatprep.subr.mxu0 %v214
    %258 = vmatpush1.msra.mxu0 %v213
    %259 = vmatprep.subr.mxu0 %v216
    %260 = vmatpush1.msra.mxu0 %v215
    %261 = vmatprep.subr.mxu0 %v218
    %262 = vmatpush1.msra.mxu0 %v217
    %263 = vmatprep.subr.mxu0 %v220
    %264 = vmatpush1.msra.mxu0 %v219
    %265 = vmatprep.subr.mxu0 %v222
    %266 = vmatpush1.msra.mxu0 %v221
    %267 = vmatprep.subr.mxu0 %v224
    %268 = vmatpush1.msra.mxu0 %v223
    %269 = vmatprep.subr.mxu0 %v226
    %270 = vmatpush1.msra.mxu0 %v225
    %271 = vmatprep.subr.mxu0 %v228
    %272 = vmatpush1.msra.mxu0 %v227
    %273 = vmatprep.subr.mxu0 %v230
    %274 = vmatpush1.msra.mxu0 %v229
    %275 = vmatprep.subr.mxu0 0.0
    %276 = vmatpush1.msra.mxu0 0.0
    %277 = vmatprep.subr.mxu0 0.0
    %278 = vmatpush1.msra.mxu0 0.0
    %279 = vmatprep.subr.mxu0 0.0
    %280 = vmatpush1.msra.mxu0 0.0
    %281 = vmatprep.subr.mxu0 0.0
    %282 = vmatpush1.msra.mxu0 0.0
    %283 = vmatprep.subr.mxu0 0.0
    %284 = vmatpush1.msra.mxu0 0.0
    %285 = vmatprep.subr.mxu0 0.0
    %286 = vmatpush1.msra.mxu0 0.0
    %287 = vmatprep.subr.mxu0 0.0
    %288 = vmatpush1.msra.mxu0 0.0
    %289 = vmatprep.subr.mxu0 0.0
    %290 = vmatpush1.msra.mxu0 0.0
    %291 = vmatprep.subr.mxu0 0.0
    %292 = vmatpush1.msra.mxu0 0.0
    %293 = vmatprep.subr.mxu0 0.0
    %294 = vmatpush1.msra.mxu0 0.0
    %295 = vmatprep.subr.mxu0 0.0
    %296 = vmatpush1.msra.mxu0 0.0
    %297 = vmatprep.subr.mxu0 0.0
    %298 = vmatpush1.msra.mxu0 0.0
    %299 = vmatprep.subr.mxu0 0.0
    %300 = vmatpush1.msra.mxu0 0.0
    %301 = vmatprep.subr.mxu0 0.0
    %302 = vmatpush1.msra.mxu0 0.0
    %303 = vmatprep.subr.mxu0 0.0
    %304 = vmatpush1.msra.mxu0 0.0
    %305 = vmatprep.subr.mxu0 0.0
    %306 = vmatpush1.msra.mxu0 0.0
    %307 = vmatprep.mubr.f32.mxu0 0.0
    %308 = vmatmul.mubr.f32.gmra.mrb[0].mxu0 %v191
    %v309 = vpop.f32.mrb[0].mxu0
    %v310 = vadd.f32 %v236, %v309
    %v311 = vpop.f32.mrb[0].mxu0
    %v312 = vadd.f32 %v240, %v311
    %313 = vmatprep.mubr.f32.mxu0 0.0
    %314 = vmatmul.mubr.f32.gmra.mrb[0].mxu0 %v198
    %v315 = vpop.f32.mrb[0].mxu0
    %v316 = vadd.f32 %v236, %v315
    %v317 = vpop.f32.mrb[0].mxu0
    %v318 = vadd.f32 %v240, %v317
    %319 = vdwg.mxu0
    %v320 = vld [vmem:[#allocation11] sm:$0xff]
    %v321 = vld [vmem:[#allocation11 + $0x8] sm:$0xff]
    %v322 = vld [vmem:[#allocation11 + $0x10] sm:$0xff]
    %v323 = vld [vmem:[#allocation11 + $0x18] sm:$0xff]
    %v324 = vld [vmem:[#allocation11 + $0x20] sm:$0xff]
    %v325 = vld [vmem:[#allocation11 + $0x28] sm:$0xff]
    %v326 = vld [vmem:[#allocation11 + $0x30] sm:$0xff]
    %v327 = vld [vmem:[#allocation11 + $0x38] sm:$0xff]
    %v328 = vld [vmem:[#allocation11 + $0x40] sm:$0xff]
    %v329 = vld [vmem:[#allocation11 + $0x48] sm:$0xff]
    %v330 = vld [vmem:[#allocation11 + $0x50] sm:$0xff]
    %v331 = vld [vmem:[#allocation11 + $0x58] sm:$0xff]
    %v332 = vld [vmem:[#allocation11 + $0x60] sm:$0xff]
    %v333 = vld [vmem:[#allocation11 + $0x68] sm:$0xff]
    %v334 = vld [vmem:[#allocation11 + $0x70] sm:$0xff]
    %v335 = vld [vmem:[#allocation11 + $0x78] sm:$0xff]
    %v336 = vld [vmem:[#allocation11 + $0x80] sm:$0xff]
    %v337 = vld [vmem:[#allocation11 + $0x88] sm:$0xff]
    %v338 = vld [vmem:[#allocation11 + $0x90] sm:$0xff]
    %v339 = vld [vmem:[#allocation11 + $0x98] sm:$0xff]
    %v340 = vld [vmem:[#allocation11 + $0xa0] sm:$0xff]
    %v341 = vld [vmem:[#allocation11 + $0xa8] sm:$0xff]
    %v342 = vld [vmem:[#allocation11 + $0xb0] sm:$0xff]
    %v343 = vld [vmem:[#allocation11 + $0xb8] sm:$0xff]
    %v344 = vld [vmem:[#allocation11 + $0xc0] sm:$0xff]
    %v345 = vld [vmem:[#allocation11 + $0xc8] sm:$0xff]
    %v346 = vld [vmem:[#allocation11 + $0xd0] sm:$0xff]
    %v347 = vld [vmem:[#allocation11 + $0xd8] sm:$0xff]
    %v348 = vld [vmem:[#allocation11 + $0xe0] sm:$0xff]
    %v349 = vld [vmem:[#allocation11 + $0xe8] sm:$0xff]
    %v350 = vld [vmem:[#allocation11 + $0xf0] sm:$0xff]
    %v351 = vld [vmem:[#allocation11 + $0xf8] sm:$0xff]
    %v352 = vld [vmem:[#allocation11 + $0x100] sm:$0xff]
    %v353 = vld [vmem:[#allocation11 + $0x108] sm:$0xff]
    %v354 = vld [vmem:[#allocation11 + $0x110] sm:$0xff]
    %v355 = vld [vmem:[#allocation11 + $0x118] sm:$0xff]
    %v356 = vld [vmem:[#allocation11 + $0x120] sm:$0xff]
    %v357 = vld [vmem:[#allocation11 + $0x128] sm:$0xff]
    %v358 = vld [vmem:[#allocation11 + $0x130] sm:$0xff]
    %v359 = vld [vmem:[#allocation11 + $0x138] sm:$0xff]
    %v360 = vld [vmem:[#allocation11 + $0x140] sm:$0xff]
    %v361 = vld [vmem:[#allocation11 + $0x148] sm:$0xff]
    %v362 = vld [vmem:[#allocation11 + $0x150] sm:$0xff]
    %v363 = vld [vmem:[#allocation11 + $0x158] sm:$0xff]
    %v364 = vld [vmem:[#allocation11 + $0x160] sm:$0xff]
    %v365 = vld [vmem:[#allocation11 + $0x168] sm:$0xff]
    %v366 = vld [vmem:[#allocation11 + $0x170] sm:$0xff]
    %v367 = vld [vmem:[#allocation11 + $0x178] sm:$0xff]
    %v368 = vld [vmem:[#allocation11 + $0x180] sm:$0xff]
    %v369 = vld [vmem:[#allocation11 + $0x188] sm:$0xff]
    %v370 = vld [vmem:[#allocation11 + $0x190] sm:$0xff]
    %v371 = vld [vmem:[#allocation11 + $0x198] sm:$0xff]
    %v372 = vld [vmem:[#allocation11 + $0x1a0] sm:$0xff]
    %v373 = vld [vmem:[#allocation11 + $0x1a8] sm:$0xff]
    %v374 = vld [vmem:[#allocation11 + $0x1b0] sm:$0xff]
    %v375 = vld [vmem:[#allocation11 + $0x1b8] sm:$0xff]
    %v376 = vld [vmem:[#allocation11 + $0x1c0] sm:$0xff]
    %v377 = vld [vmem:[#allocation11 + $0x1c8] sm:$0xff]
    %v378 = vld [vmem:[#allocation11 + $0x1d0] sm:$0xff]
    %v379 = vld [vmem:[#allocation11 + $0x1d8] sm:$0xff]
    %v380 = vld [vmem:[#allocation11 + $0x1e0] sm:$0xff]
    %v381 = vld [vmem:[#allocation11 + $0x1e8] sm:$0xff]
    %v382 = vld [vmem:[#allocation11 + $0x1f0] sm:$0xff]
    %v383 = vld [vmem:[#allocation11 + $0x1f8] sm:$0xff]
    %384 = vmatprep.subr.mxu0 %v321
    %385 = vmatpush1.msra.mxu0 %v320
    %386 = vmatprep.subr.mxu0 %v323
    %387 = vmatpush1.msra.mxu0 %v322
    %388 = vmatprep.subr.mxu0 %v325
    %389 = vmatpush1.msra.mxu0 %v324
    %390 = vmatprep.subr.mxu0 %v327
    %391 = vmatpush1.msra.mxu0 %v326
    %392 = vmatprep.subr.mxu0 %v329
    %393 = vmatpush1.msra.mxu0 %v328
    %394 = vmatprep.subr.mxu0 %v331
    %395 = vmatpush1.msra.mxu0 %v330
    %396 = vmatprep.subr.mxu0 %v333
    %397 = vmatpush1.msra.mxu0 %v332
    %398 = vmatprep.subr.mxu0 %v335
    %399 = vmatpush1.msra.mxu0 %v334
    %400 = vmatprep.subr.mxu0 %v337
    %401 = vmatpush1.msra.mxu0 %v336
    %402 = vmatprep.subr.mxu0 %v339
    %403 = vmatpush1.msra.mxu0 %v338
    %404 = vmatprep.subr.mxu0 %v341
    %405 = vmatpush1.msra.mxu0 %v340
    %406 = vmatprep.subr.mxu0 %v343
    %407 = vmatpush1.msra.mxu0 %v342
    %408 = vmatprep.subr.mxu0 %v345
    %409 = vmatpush1.msra.mxu0 %v344
    %410 = vmatprep.subr.mxu0 %v347
    %411 = vmatpush1.msra.mxu0 %v346
    %412 = vmatprep.subr.mxu0 %v349
    %413 = vmatpush1.msra.mxu0 %v348
    %414 = vmatprep.subr.mxu0 %v351
    %415 = vmatpush1.msra.mxu0 %v350
    %416 = vmatprep.subr.mxu0 %v353
    %417 = vmatpush1.msra.mxu0 %v352
    %418 = vmatprep.subr.mxu0 %v355
    %419 = vmatpush1.msra.mxu0 %v354
    %420 = vmatprep.subr.mxu0 %v357
    %421 = vmatpush1.msra.mxu0 %v356
    %422 = vmatprep.subr.mxu0 %v359
    %423 = vmatpush1.msra.mxu0 %v358
    %424 = vmatprep.subr.mxu0 %v361
    %425 = vmatpush1.msra.mxu0 %v360
    %426 = vmatprep.subr.mxu0 %v363
    %427 = vmatpush1.msra.mxu0 %v362
    %428 = vmatprep.subr.mxu0 %v365
    %429 = vmatpush1.msra.mxu0 %v364
    %430 = vmatprep.subr.mxu0 %v367
    %431 = vmatpush1.msra.mxu0 %v366
    %432 = vmatprep.subr.mxu0 %v369
    %433 = vmatpush1.msra.mxu0 %v368
    %434 = vmatprep.subr.mxu0 %v371
    %435 = vmatpush1.msra.mxu0 %v370
    %436 = vmatprep.subr.mxu0 %v373
    %437 = vmatpush1.msra.mxu0 %v372
    %438 = vmatprep.subr.mxu0 %v375
    %439 = vmatpush1.msra.mxu0 %v374
    %440 = vmatprep.subr.mxu0 %v377
    %441 = vmatpush1.msra.mxu0 %v376
    %442 = vmatprep.subr.mxu0 %v379
    %443 = vmatpush1.msra.mxu0 %v378
    %444 = vmatprep.subr.mxu0 %v381
    %445 = vmatpush1.msra.mxu0 %v380
    %446 = vmatprep.subr.mxu0 %v383
    %447 = vmatpush1.msra.mxu0 %v382
    %448 = vmatprep.mubr.f32.mxu0 0.0
    %449 = vmatmul.mubr.f32.gmra.mrb[0].mxu0 0.0
    %v450 = vpop.f32.mrb[0].mxu0
    %v451 = vadd.f32 0.0, %v450
    %v452 = vpop.f32.mrb[0].mxu0
    %v453 = vadd.f32 0.0, %v452
    %454 = vdwg.mxu0
    %v455 = vadd.f32 %v310, %v451
    %v456 = vadd.f32 %v312, %v453
    %v457 = vtanh.pop %v455
    %v458 = vtanh.pop %v456
    %459 = vmatprep.subr.mxu0 %v321
    %460 = vmatpush1.msra.mxu0 %v320
    %461 = vmatprep.subr.mxu0 %v323
    %462 = vmatpush1.msra.mxu0 %v322
    %463 = vmatprep.subr.mxu0 %v325
    %464 = vmatpush1.msra.mxu0 %v324
    %465 = vmatprep.subr.mxu0 %v327
    %466 = vmatpush1.msra.mxu0 %v326
    %467 = vmatprep.subr.mxu0 %v329
    %468 = vmatpush1.msra.mxu0 %v328
    %469 = vmatprep.subr.mxu0 %v331
    %470 = vmatpush1.msra.mxu0 %v330
    %471 = vmatprep.subr.mxu0 %v333
    %472 = vmatpush1.msra.mxu0 %v332
    %473 = vmatprep.subr.mxu0 %v335
    %474 = vmatpush1.msra.mxu0 %v334
    %475 = vmatprep.subr.mxu0 %v337
    %476 = vmatpush1.msra.mxu0 %v336
    %477 = vmatprep.subr.mxu0 %v339
    %478 = vmatpush1.msra.mxu0 %v338
    %479 = vmatprep.subr.mxu0 %v341
    %480 = vmatpush1.msra.mxu0 %v340
    %481 = vmatprep.subr.mxu0 %v343
    %482 = vmatpush1.msra.mxu0 %v342
    %483 = vmatprep.subr.mxu0 %v345
    %484 = vmatpush1.msra.mxu0 %v344
    %485 = vmatprep.subr.mxu0 %v347
    %486 = vmatpush1.msra.mxu0 %v346
    %487 = vmatprep.subr.mxu0 %v349
    %488 = vmatpush1.msra.mxu0 %v348
    %489 = vmatprep.subr.mxu0 %v351
    %490 = vmatpush1.msra.mxu0 %v350
    %491 = vmatprep.subr.mxu0 %v353
    %492 = vmatpush1.msra.mxu0 %v352
    %493 = vmatprep.subr.mxu0 %v355
    %494 = vmatpush1.msra.mxu0 %v354
    %495 = vmatprep.subr.mxu0 %v357
    %496 = vmatpush1.msra.mxu0 %v356
    %497 = vmatprep.subr.mxu0 %v359
    %498 = vmatpush1.msra.mxu0 %v358
    %499 = vmatprep.subr.mxu0 %v361
    %500 = vmatpush1.msra.mxu0 %v360
    %501 = vmatprep.subr.mxu0 %v363
    %502 = vmatpush1.msra.mxu0 %v362
    %503 = vmatprep.subr.mxu0 %v365
    %504 = vmatpush1.msra.mxu0 %v364
    %505 = vmatprep.subr.mxu0 %v367
    %506 = vmatpush1.msra.mxu0 %v366
    %507 = vmatprep.subr.mxu0 %v369
    %508 = vmatpush1.msra.mxu0 %v368
    %509 = vmatprep.subr.mxu0 %v371
    %510 = vmatpush1.msra.mxu0 %v370
    %511 = vmatprep.subr.mxu0 %v373
    %512 = vmatpush1.msra.mxu0 %v372
    %513 = vmatprep.subr.mxu0 %v375
    %514 = vmatpush1.msra.mxu0 %v374
    %515 = vmatprep.subr.mxu0 %v377
    %516 = vmatpush1.msra.mxu0 %v376
    %517 = vmatprep.subr.mxu0 %v379
    %518 = vmatpush1.msra.mxu0 %v378
    %519 = vmatprep.subr.mxu0 %v381
    %520 = vmatpush1.msra.mxu0 %v380
    %521 = vmatprep.subr.mxu0 %v383
    %522 = vmatpush1.msra.mxu0 %v382
    %523 = vmatprep.mubr.f32.mxu0 %v458
    %524 = vmatmul.mubr.f32.gmra.mrb[0].mxu0 %v457
    %v525 = vpop.f32.mrb[0].mxu0
    %v526 = vadd.f32 0.0, %v525
    %v527 = vpop.f32.mrb[0].mxu0
    %v528 = vadd.f32 0.0, %v527
    %529 = vdwg.mxu0
    %v532 = vrot.slane %v526, 6
    %v533 = vrot.slane %v528, 6
    %v536 = vadd.f32 %v310, %v532
    %v537 = vadd.f32 %v312, %v533
    %v538 = vtanh.pop %v536
    %v539 = vtanh.pop %v537
    %v542 = vrot.slane %v538, 2
    %v543 = vrot.slane %v539, 2
    %546 = vmatprep.subr.mxu0 %v321
    %547 = vmatpush1.msra.mxu0 %v320
    %548 = vmatprep.subr.mxu0 %v323
    %549 = vmatpush1.msra.mxu0 %v322
    %550 = vmatprep.subr.mxu0 %v325
    %551 = vmatpush1.msra.mxu0 %v324
    %552 = vmatprep.subr.mxu0 %v327
    %553 = vmatpush1.msra.mxu0 %v326
    %554 = vmatprep.subr.mxu0 %v329
    %555 = vmatpush1.msra.mxu0 %v328
    %556 = vmatprep.subr.mxu0 %v331
    %557 = vmatpush1.msra.mxu0 %v330
    %558 = vmatprep.subr.mxu0 %v333
    %559 = vmatpush1.msra.mxu0 %v332
    %560 = vmatprep.subr.mxu0 %v335
    %561 = vmatpush1.msra.mxu0 %v334
    %562 = vmatprep.subr.mxu0 %v337
    %563 = vmatpush1.msra.mxu0 %v336
    %564 = vmatprep.subr.mxu0 %v339
    %565 = vmatpush1.msra.mxu0 %v338
    %566 = vmatprep.subr.mxu0 %v341
    %567 = vmatpush1.msra.mxu0 %v340
    %568 = vmatprep.subr.mxu0 %v343
    %569 = vmatpush1.msra.mxu0 %v342
    %570 = vmatprep.subr.mxu0 %v345
    %571 = vmatpush1.msra.mxu0 %v344
    %572 = vmatprep.subr.mxu0 %v347
    %573 = vmatpush1.msra.mxu0 %v346
    %574 = vmatprep.subr.mxu0 %v349
    %575 = vmatpush1.msra.mxu0 %v348
    %576 = vmatprep.subr.mxu0 %v351
    %577 = vmatpush1.msra.mxu0 %v350
    %578 = vmatprep.subr.mxu0 %v353
    %579 = vmatpush1.msra.mxu0 %v352
    %580 = vmatprep.subr.mxu0 %v355
    %581 = vmatpush1.msra.mxu0 %v354
    %582 = vmatprep.subr.mxu0 %v357
    %583 = vmatpush1.msra.mxu0 %v356
    %584 = vmatprep.subr.mxu0 %v359
    %585 = vmatpush1.msra.mxu0 %v358
    %586 = vmatprep.subr.mxu0 %v361
    %587 = vmatpush1.msra.mxu0 %v360
    %588 = vmatprep.subr.mxu0 %v363
    %589 = vmatpush1.msra.mxu0 %v362
    %590 = vmatprep.subr.mxu0 %v365
    %591 = vmatpush1.msra.mxu0 %v364
    %592 = vmatprep.subr.mxu0 %v367
    %593 = vmatpush1.msra.mxu0 %v366
    %594 = vmatprep.subr.mxu0 %v369
    %595 = vmatpush1.msra.mxu0 %v368
    %596 = vmatprep.subr.mxu0 %v371
    %597 = vmatpush1.msra.mxu0 %v370
    %598 = vmatprep.subr.mxu0 %v373
    %599 = vmatpush1.msra.mxu0 %v372
    %600 = vmatprep.subr.mxu0 %v375
    %601 = vmatpush1.msra.mxu0 %v374
    %602 = vmatprep.subr.mxu0 %v377
    %603 = vmatpush1.msra.mxu0 %v376
    %604 = vmatprep.subr.mxu0 %v379
    %605 = vmatpush1.msra.mxu0 %v378
    %606 = vmatprep.subr.mxu0 %v381
    %607 = vmatpush1.msra.mxu0 %v380
    %608 = vmatprep.subr.mxu0 %v383
    %609 = vmatpush1.msra.mxu0 %v382
    %610 = vmatprep.mubr.f32.mxu0 %v543
    %611 = vmatmul.mubr.f32.gmra.mrb[0].mxu0 %v542
    %v612 = vpop.f32.mrb[0].mxu0
    %v613 = vadd.f32 0.0, %v612
    %v614 = vpop.f32.mrb[0].mxu0
    %v615 = vadd.f32 0.0, %v614
    %616 = vdwg.mxu0
    %v619 = vrot.slane %v613, 4
    %v620 = vrot.slane %v615, 4
    %v623 = vadd.f32 %v310, %v619
    %v624 = vadd.f32 %v312, %v620
    %v625 = vtanh.pop %v623
    %v626 = vtanh.pop %v624
    %v629 = vrot.slane %v625, 4
    %v630 = vrot.slane %v626, 4
    %633 = vmatprep.subr.mxu0 %v321
    %634 = vmatpush1.msra.mxu0 %v320
    %635 = vmatprep.subr.mxu0 %v323
    %636 = vmatpush1.msra.mxu0 %v322
    %637 = vmatprep.subr.mxu0 %v325
    %638 = vmatpush1.msra.mxu0 %v324
    %639 = vmatprep.subr.mxu0 %v327
    %640 = vmatpush1.msra.mxu0 %v326
    %641 = vmatprep.subr.mxu0 %v329
    %642 = vmatpush1.msra.mxu0 %v328
    %643 = vmatprep.subr.mxu0 %v331
    %644 = vmatpush1.msra.mxu0 %v330
    %645 = vmatprep.subr.mxu0 %v333
    %646 = vmatpush1.msra.mxu0 %v332
    %647 = vmatprep.subr.mxu0 %v335
    %648 = vmatpush1.msra.mxu0 %v334
    %649 = vmatprep.subr.mxu0 %v337
    %650 = vmatpush1.msra.mxu0 %v336
    %651 = vmatprep.subr.mxu0 %v339
    %652 = vmatpush1.msra.mxu0 %v338
    %653 = vmatprep.subr.mxu0 %v341
    %654 = vmatpush1.msra.mxu0 %v340
    %655 = vmatprep.subr.mxu0 %v343
    %656 = vmatpush1.msra.mxu0 %v342
    %657 = vmatprep.subr.mxu0 %v345
    %658 = vmatpush1.msra.mxu0 %v344
    %659 = vmatprep.subr.mxu0 %v347
    %660 = vmatpush1.msra.mxu0 %v346
    %661 = vmatprep.subr.mxu0 %v349
    %662 = vmatpush1.msra.mxu0 %v348
    %663 = vmatprep.subr.mxu0 %v351
    %664 = vmatpush1.msra.mxu0 %v350
    %665 = vmatprep.subr.mxu0 %v353
    %666 = vmatpush1.msra.mxu0 %v352
    %667 = vmatprep.subr.mxu0 %v355
    %668 = vmatpush1.msra.mxu0 %v354
    %669 = vmatprep.subr.mxu0 %v357
    %670 = vmatpush1.msra.mxu0 %v356
    %671 = vmatprep.subr.mxu0 %v359
    %672 = vmatpush1.msra.mxu0 %v358
    %673 = vmatprep.subr.mxu0 %v361
    %674 = vmatpush1.msra.mxu0 %v360
    %675 = vmatprep.subr.mxu0 %v363
    %676 = vmatpush1.msra.mxu0 %v362
    %677 = vmatprep.subr.mxu0 %v365
    %678 = vmatpush1.msra.mxu0 %v364
    %679 = vmatprep.subr.mxu0 %v367
    %680 = vmatpush1.msra.mxu0 %v366
    %681 = vmatprep.subr.mxu0 %v369
    %682 = vmatpush1.msra.mxu0 %v368
    %683 = vmatprep.subr.mxu0 %v371
    %684 = vmatpush1.msra.mxu0 %v370
    %685 = vmatprep.subr.mxu0 %v373
    %686 = vmatpush1.msra.mxu0 %v372
    %687 = vmatprep.subr.mxu0 %v375
    %688 = vmatpush1.msra.mxu0 %v374
    %689 = vmatprep.subr.mxu0 %v377
    %690 = vmatpush1.msra.mxu0 %v376
    %691 = vmatprep.subr.mxu0 %v379
    %692 = vmatpush1.msra.mxu0 %v378
    %693 = vmatprep.subr.mxu0 %v381
    %694 = vmatpush1.msra.mxu0 %v380
    %695 = vmatprep.subr.mxu0 %v383
    %696 = vmatpush1.msra.mxu0 %v382
    %697 = vmatprep.mubr.f32.mxu0 %v630
    %698 = vmatmul.mubr.f32.gmra.mrb[0].mxu0 %v629
    %v699 = vpop.f32.mrb[0].mxu0
    %v700 = vadd.f32 0.0, %v699
    %v701 = vpop.f32.mrb[0].mxu0
    %v702 = vadd.f32 0.0, %v701
    %703 = vdwg.mxu0
    %v706 = vrot.slane %v700, 2
    %v707 = vrot.slane %v702, 2
    %v710 = vadd.f32 %v310, %v706
    %v711 = vadd.f32 %v312, %v707
    %v712 = vtanh.pop %v710
    %v713 = vtanh.pop %v711
    %v716 = vrot.slane %v712, 6
    %v717 = vrot.slane %v713, 6
    %720 = vmatprep.subr.mxu0 %v321
    %721 = vmatpush1.msra.mxu0 %v320
    %722 = vmatprep.subr.mxu0 %v323
    %723 = vmatpush1.msra.mxu0 %v322
    %724 = vmatprep.subr.mxu0 %v325
    %725 = vmatpush1.msra.mxu0 %v324
    %726 = vmatprep.subr.mxu0 %v327
    %727 = vmatpush1.msra.mxu0 %v326
    %728 = vmatprep.subr.mxu0 %v329
    %729 = vmatpush1.msra.mxu0 %v328
    %730 = vmatprep.subr.mxu0 %v331
    %731 = vmatpush1.msra.mxu0 %v330
    %732 = vmatprep.subr.mxu0 %v333
    %733 = vmatpush1.msra.mxu0 %v332
    %734 = vmatprep.subr.mxu0 %v335
    %735 = vmatpush1.msra.mxu0 %v334
    %736 = vmatprep.subr.mxu0 %v337
    %737 = vmatpush1.msra.mxu0 %v336
    %738 = vmatprep.subr.mxu0 %v339
    %739 = vmatpush1.msra.mxu0 %v338
    %740 = vmatprep.subr.mxu0 %v341
    %741 = vmatpush1.msra.mxu0 %v340
    %742 = vmatprep.subr.mxu0 %v343
    %743 = vmatpush1.msra.mxu0 %v342
    %744 = vmatprep.subr.mxu0 %v345
    %745 = vmatpush1.msra.mxu0 %v344
    %746 = vmatprep.subr.mxu0 %v347
    %747 = vmatpush1.msra.mxu0 %v346
    %748 = vmatprep.subr.mxu0 %v349
    %749 = vmatpush1.msra.mxu0 %v348
    %750 = vmatprep.subr.mxu0 %v351
    %751 = vmatpush1.msra.mxu0 %v350
    %752 = vmatprep.subr.mxu0 %v353
    %753 = vmatpush1.msra.mxu0 %v352
    %754 = vmatprep.subr.mxu0 %v355
    %755 = vmatpush1.msra.mxu0 %v354
    %756 = vmatprep.subr.mxu0 %v357
    %757 = vmatpush1.msra.mxu0 %v356
    %758 = vmatprep.subr.mxu0 %v359
    %759 = vmatpush1.msra.mxu0 %v358
    %760 = vmatprep.subr.mxu0 %v361
    %761 = vmatpush1.msra.mxu0 %v360
    %762 = vmatprep.subr.mxu0 %v363
    %763 = vmatpush1.msra.mxu0 %v362
    %764 = vmatprep.subr.mxu0 %v365
    %765 = vmatpush1.msra.mxu0 %v364
    %766 = vmatprep.subr.mxu0 %v367
    %767 = vmatpush1.msra.mxu0 %v366
    %768 = vmatprep.subr.mxu0 %v369
    %769 = vmatpush1.msra.mxu0 %v368
    %770 = vmatprep.subr.mxu0 %v371
    %771 = vmatpush1.msra.mxu0 %v370
    %772 = vmatprep.subr.mxu0 %v373
    %773 = vmatpush1.msra.mxu0 %v372
    %774 = vmatprep.subr.mxu0 %v375
    %775 = vmatpush1.msra.mxu0 %v374
    %776 = vmatprep.subr.mxu0 %v377
    %777 = vmatpush1.msra.mxu0 %v376
    %778 = vmatprep.subr.mxu0 %v379
    %779 = vmatpush1.msra.mxu0 %v378
    %780 = vmatprep.subr.mxu0 %v381
    %781 = vmatpush1.msra.mxu0 %v380
    %782 = vmatprep.subr.mxu0 %v383
    %783 = vmatpush1.msra.mxu0 %v382
    %784 = vmatprep.mubr.f32.mxu0 %v717
    %785 = vmatmul.mubr.f32.gmra.mrb[0].mxu0 %v716
    %v786 = vpop.f32.mrb[0].mxu0
    %v787 = vadd.f32 0.0, %v786
    %v788 = vpop.f32.mrb[0].mxu0
    %v789 = vadd.f32 0.0, %v788
    %790 = vdwg.mxu0
    %v791 = vadd.f32 %v316, %v787
    %v792 = vadd.f32 %v318, %v789
    %v793 = vtanh.pop %v791
    %v794 = vtanh.pop %v792
    %795 = vmatprep.subr.mxu0 %v321
    %796 = vmatpush1.msra.mxu0 %v320
    %797 = vmatprep.subr.mxu0 %v323
    %798 = vmatpush1.msra.mxu0 %v322
    %799 = vmatprep.subr.mxu0 %v325
    %800 = vmatpush1.msra.mxu0 %v324
    %801 = vmatprep.subr.mxu0 %v327
    %802 = vmatpush1.msra.mxu0 %v326
    %803 = vmatprep.subr.mxu0 %v329
    %804 = vmatpush1.msra.mxu0 %v328
    %805 = vmatprep.subr.mxu0 %v331
    %806 = vmatpush1.msra.mxu0 %v330
    %807 = vmatprep.subr.mxu0 %v333
    %808 = vmatpush1.msra.mxu0 %v332
    %809 = vmatprep.subr.mxu0 %v335
    %810 = vmatpush1.msra.mxu0 %v334
    %811 = vmatprep.subr.mxu0 %v337
    %812 = vmatpush1.msra.mxu0 %v336
    %813 = vmatprep.subr.mxu0 %v339
    %814 = vmatpush1.msra.mxu0 %v338
    %815 = vmatprep.subr.mxu0 %v341
    %816 = vmatpush1.msra.mxu0 %v340
    %817 = vmatprep.subr.mxu0 %v343
    %818 = vmatpush1.msra.mxu0 %v342
    %819 = vmatprep.subr.mxu0 %v345
    %820 = vmatpush1.msra.mxu0 %v344
    %821 = vmatprep.subr.mxu0 %v347
    %822 = vmatpush1.msra.mxu0 %v346
    %823 = vmatprep.subr.mxu0 %v349
    %824 = vmatpush1.msra.mxu0 %v348
    %825 = vmatprep.subr.mxu0 %v351
    %826 = vmatpush1.msra.mxu0 %v350
    %827 = vmatprep.subr.mxu0 %v353
    %828 = vmatpush1.msra.mxu0 %v352
    %829 = vmatprep.subr.mxu0 %v355
    %830 = vmatpush1.msra.mxu0 %v354
    %831 = vmatprep.subr.mxu0 %v357
    %832 = vmatpush1.msra.mxu0 %v356
    %833 = vmatprep.subr.mxu0 %v359
    %834 = vmatpush1.msra.mxu0 %v358
    %835 = vmatprep.subr.mxu0 %v361
    %836 = vmatpush1.msra.mxu0 %v360
    %837 = vmatprep.subr.mxu0 %v363
    %838 = vmatpush1.msra.mxu0 %v362
    %839 = vmatprep.subr.mxu0 %v365
    %840 = vmatpush1.msra.mxu0 %v364
    %841 = vmatprep.subr.mxu0 %v367
    %842 = vmatpush1.msra.mxu0 %v366
    %843 = vmatprep.subr.mxu0 %v369
    %844 = vmatpush1.msra.mxu0 %v368
    %845 = vmatprep.subr.mxu0 %v371
    %846 = vmatpush1.msra.mxu0 %v370
    %847 = vmatprep.subr.mxu0 %v373
    %848 = vmatpush1.msra.mxu0 %v372
    %849 = vmatprep.subr.mxu0 %v375
    %850 = vmatpush1.msra.mxu0 %v374
    %851 = vmatprep.subr.mxu0 %v377
    %852 = vmatpush1.msra.mxu0 %v376
    %853 = vmatprep.subr.mxu0 %v379
    %854 = vmatpush1.msra.mxu0 %v378
    %855 = vmatprep.subr.mxu0 %v381
    %856 = vmatpush1.msra.mxu0 %v380
    %857 = vmatprep.subr.mxu0 %v383
    %858 = vmatpush1.msra.mxu0 %v382
    %859 = vmatprep.mubr.f32.mxu0 %v794
    %860 = vmatmul.mubr.f32.gmra.mrb[0].mxu0 %v793
    %v861 = vpop.f32.mrb[0].mxu0
    %v862 = vadd.f32 0.0, %v861
    %v863 = vpop.f32.mrb[0].mxu0
    %v864 = vadd.f32 0.0, %v863
    %865 = vdwg.mxu0
    %v868 = vrot.slane %v862, 6
    %v869 = vrot.slane %v864, 6
    %v872 = vadd.f32 %v316, %v868
    %v873 = vadd.f32 %v318, %v869
    %v874 = vtanh.pop %v872
    %v875 = vtanh.pop %v873
    %v878 = vrot.slane %v874, 2
    %v879 = vrot.slane %v875, 2
    %882 = vmatprep.subr.mxu0 %v321
    %883 = vmatpush1.msra.mxu0 %v320
    %884 = vmatprep.subr.mxu0 %v323
    %885 = vmatpush1.msra.mxu0 %v322
    %886 = vmatprep.subr.mxu0 %v325
    %887 = vmatpush1.msra.mxu0 %v324
    %888 = vmatprep.subr.mxu0 %v327
    %889 = vmatpush1.msra.mxu0 %v326
    %890 = vmatprep.subr.mxu0 %v329
    %891 = vmatpush1.msra.mxu0 %v328
    %892 = vmatprep.subr.mxu0 %v331
    %893 = vmatpush1.msra.mxu0 %v330
    %894 = vmatprep.subr.mxu0 %v333
    %895 = vmatpush1.msra.mxu0 %v332
    %896 = vmatprep.subr.mxu0 %v335
    %897 = vmatpush1.msra.mxu0 %v334
    %898 = vmatprep.subr.mxu0 %v337
    %899 = vmatpush1.msra.mxu0 %v336
    %900 = vmatprep.subr.mxu0 %v339
    %901 = vmatpush1.msra.mxu0 %v338
    %902 = vmatprep.subr.mxu0 %v341
    %903 = vmatpush1.msra.mxu0 %v340
    %904 = vmatprep.subr.mxu0 %v343
    %905 = vmatpush1.msra.mxu0 %v342
    %906 = vmatprep.subr.mxu0 %v345
    %907 = vmatpush1.msra.mxu0 %v344
    %908 = vmatprep.subr.mxu0 %v347
    %909 = vmatpush1.msra.mxu0 %v346
    %910 = vmatprep.subr.mxu0 %v349
    %911 = vmatpush1.msra.mxu0 %v348
    %912 = vmatprep.subr.mxu0 %v351
    %913 = vmatpush1.msra.mxu0 %v350
    %914 = vmatprep.subr.mxu0 %v353
    %915 = vmatpush1.msra.mxu0 %v352
    %916 = vmatprep.subr.mxu0 %v355
    %917 = vmatpush1.msra.mxu0 %v354
    %918 = vmatprep.subr.mxu0 %v357
    %919 = vmatpush1.msra.mxu0 %v356
    %920 = vmatprep.subr.mxu0 %v359
    %921 = vmatpush1.msra.mxu0 %v358
    %922 = vmatprep.subr.mxu0 %v361
    %923 = vmatpush1.msra.mxu0 %v360
    %924 = vmatprep.subr.mxu0 %v363
    %925 = vmatpush1.msra.mxu0 %v362
    %926 = vmatprep.subr.mxu0 %v365
    %927 = vmatpush1.msra.mxu0 %v364
    %928 = vmatprep.subr.mxu0 %v367
    %929 = vmatpush1.msra.mxu0 %v366
    %930 = vmatprep.subr.mxu0 %v369
    %931 = vmatpush1.msra.mxu0 %v368
    %932 = vmatprep.subr.mxu0 %v371
    %933 = vmatpush1.msra.mxu0 %v370
    %934 = vmatprep.subr.mxu0 %v373
    %935 = vmatpush1.msra.mxu0 %v372
    %936 = vmatprep.subr.mxu0 %v375
    %937 = vmatpush1.msra.mxu0 %v374
    %938 = vmatprep.subr.mxu0 %v377
    %939 = vmatpush1.msra.mxu0 %v376
    %940 = vmatprep.subr.mxu0 %v379
    %941 = vmatpush1.msra.mxu0 %v378
    %942 = vmatprep.subr.mxu0 %v381
    %943 = vmatpush1.msra.mxu0 %v380
    %944 = vmatprep.subr.mxu0 %v383
    %945 = vmatpush1.msra.mxu0 %v382
    %946 = vmatprep.mubr.f32.mxu0 %v879
    %947 = vmatmul.mubr.f32.gmra.mrb[0].mxu0 %v878
    %v948 = vpop.f32.mrb[0].mxu0
    %v949 = vadd.f32 0.0, %v948
    %v950 = vpop.f32.mrb[0].mxu0
    %v951 = vadd.f32 0.0, %v950
    %952 = vdwg.mxu0
    %v955 = vrot.slane %v949, 4
    %v956 = vrot.slane %v951, 4
    %v959 = vadd.f32 %v316, %v955
    %v960 = vadd.f32 %v318, %v956
    %v961 = vtanh.pop %v959
    %v962 = vtanh.pop %v960
    %v965 = vrot.slane %v961, 4
    %v966 = vrot.slane %v962, 4
    %969 = vmatprep.subr.mxu0 %v321
    %970 = vmatpush1.msra.mxu0 %v320
    %971 = vmatprep.subr.mxu0 %v323
    %972 = vmatpush1.msra.mxu0 %v322
    %973 = vmatprep.subr.mxu0 %v325
    %974 = vmatpush1.msra.mxu0 %v324
    %975 = vmatprep.subr.mxu0 %v327
    %976 = vmatpush1.msra.mxu0 %v326
    %977 = vmatprep.subr.mxu0 %v329
    %978 = vmatpush1.msra.mxu0 %v328
    %979 = vmatprep.subr.mxu0 %v331
    %980 = vmatpush1.msra.mxu0 %v330
    %981 = vmatprep.subr.mxu0 %v333
    %982 = vmatpush1.msra.mxu0 %v332
    %983 = vmatprep.subr.mxu0 %v335
    %984 = vmatpush1.msra.mxu0 %v334
    %985 = vmatprep.subr.mxu0 %v337
    %986 = vmatpush1.msra.mxu0 %v336
    %987 = vmatprep.subr.mxu0 %v339
    %988 = vmatpush1.msra.mxu0 %v338
    %989 = vmatprep.subr.mxu0 %v341
    %990 = vmatpush1.msra.mxu0 %v340
    %991 = vmatprep.subr.mxu0 %v343
    %992 = vmatpush1.msra.mxu0 %v342
    %993 = vmatprep.subr.mxu0 %v345
    %994 = vmatpush1.msra.mxu0 %v344
    %995 = vmatprep.subr.mxu0 %v347
    %996 = vmatpush1.msra.mxu0 %v346
    %997 = vmatprep.subr.mxu0 %v349
    %998 = vmatpush1.msra.mxu0 %v348
    %999 = vmatprep.subr.mxu0 %v351
    %1000 = vmatpush1.msra.mxu0 %v350
    %1001 = vmatprep.subr.mxu0 %v353
    %1002 = vmatpush1.msra.mxu0 %v352
    %1003 = vmatprep.subr.mxu0 %v355
    %1004 = vmatpush1.msra.mxu0 %v354
    %1005 = vmatprep.subr.mxu0 %v357
    %1006 = vmatpush1.msra.mxu0 %v356
    %1007 = vmatprep.subr.mxu0 %v359
    %1008 = vmatpush1.msra.mxu0 %v358
    %1009 = vmatprep.subr.mxu0 %v361
    %1010 = vmatpush1.msra.mxu0 %v360
    %1011 = vmatprep.subr.mxu0 %v363
    %1012 = vmatpush1.msra.mxu0 %v362
    %1013 = vmatprep.subr.mxu0 %v365
    %1014 = vmatpush1.msra.mxu0 %v364
    %1015 = vmatprep.subr.mxu0 %v367
    %1016 = vmatpush1.msra.mxu0 %v366
    %1017 = vmatprep.subr.mxu0 %v369
    %1018 = vmatpush1.msra.mxu0 %v368
    %1019 = vmatprep.subr.mxu0 %v371
    %1020 = vmatpush1.msra.mxu0 %v370
    %1021 = vmatprep.subr.mxu0 %v373
    %1022 = vmatpush1.msra.mxu0 %v372
    %1023 = vmatprep.subr.mxu0 %v375
    %1024 = vmatpush1.msra.mxu0 %v374
    %1025 = vmatprep.subr.mxu0 %v377
    %1026 = vmatpush1.msra.mxu0 %v376
    %1027 = vmatprep.subr.mxu0 %v379
    %1028 = vmatpush1.msra.mxu0 %v378
    %1029 = vmatprep.subr.mxu0 %v381
    %1030 = vmatpush1.msra.mxu0 %v380
    %1031 = vmatprep.subr.mxu0 %v383
    %1032 = vmatpush1.msra.mxu0 %v382
    %1033 = vmatprep.mubr.f32.mxu0 %v966
    %1034 = vmatmul.mubr.f32.gmra.mrb[0].mxu0 %v965
    %v1035 = vpop.f32.mrb[0].mxu0
    %v1036 = vadd.f32 0.0, %v1035
    %v1037 = vpop.f32.mrb[0].mxu0
    %v1038 = vadd.f32 0.0, %v1037
    %1039 = vdwg.mxu0
    %v1042 = vrot.slane %v1036, 2
    %v1043 = vrot.slane %v1038, 2
    %v1046 = vadd.f32 %v316, %v1042
    %v1047 = vadd.f32 %v318, %v1043
    %v1048 = vtanh.pop %v1046
    %v1049 = vtanh.pop %v1047
    %v1050 = vrot.slane %v538, 1
    %v1051 = vrot.slane %v539, 1
    %v1054 = vrot.slane %v625, 2
    %v1055 = vrot.slane %v626, 2
    %v1058 = vrot.slane %v712, 3
    %v1059 = vrot.slane %v713, 3
    %v1064 = vrot.slane %v793, 4
    %v1065 = vrot.slane %v794, 4
    %v1068 = vrot.slane %v874, 5
    %v1069 = vrot.slane %v875, 5
    %v1072 = vrot.slane %v961, 6
    %v1073 = vrot.slane %v962, 6
    %v1078 = vrot.slane %v1048, 7
    %v1079 = vrot.slane %v1049, 7
    %v1084 = vrot.slane %v457, 1
    %v1085 = vrot.slane %v458, 1
    %v1088 = vrot.slane %v625, 3
    %v1089 = vrot.slane %v626, 3
    %v1092 = vrot.slane %v712, 4
    %v1093 = vrot.slane %v713, 4
    %v1096 = vrot.slane %v793, 5
    %v1097 = vrot.slane %v794, 5
    %v1100 = vrot.slane %v874, 6
    %v1101 = vrot.slane %v875, 6
    %v1104 = vrot.slane %v961, 7
    %v1105 = vrot.slane %v962, 7
    %v1108 = vsel %vm178, %v457, %v1050
    %v1109 = vsel %vm178, %v458, %v1051
    %v1110 = vsel %vm180, %v1108, %v1054
    %v1111 = vsel %vm180, %v1109, %v1055
    %v1112 = vsel %vm182, %v1110, %v1058
    %v1113 = vsel %vm182, %v1111, %v1059
    %v1114 = vsel %vm184, %v1112, %v1064
    %v1115 = vsel %vm184, %v1113, %v1065
    %v1116 = vsel %vm186, %v1114, %v1068
    %v1117 = vsel %vm186, %v1115, %v1069
    %v1118 = vsel %vm188, %v1116, %v1072
    %v1119 = vsel %vm188, %v1117, %v1073
    %v1120 = vsel %vm190, %v1118, %v1078
    %v1121 = vsel %vm190, %v1119, %v1079
    %v1122 = vsel %vm178, %v1084, %v542
    %v1123 = vsel %vm178, %v1085, %v543
    %v1124 = vsel %vm180, %v1122, %v1088
    %v1125 = vsel %vm180, %v1123, %v1089
    %v1126 = vsel %vm182, %v1124, %v1092
    %v1127 = vsel %vm182, %v1125, %v1093
    %v1128 = vsel %vm184, %v1126, %v1096
    %v1129 = vsel %vm184, %v1127, %v1097
    %v1130 = vsel %vm186, %v1128, %v1100
    %v1131 = vsel %vm186, %v1129, %v1101
    %v1132 = vsel %vm188, %v1130, %v1104
    %v1133 = vsel %vm188, %v1131, %v1105
    %v1134 = vsel %vm190, %v1132, %v1048
    %v1135 = vsel %vm190, %v1133, %v1049
    %s1136 = smul.u32 256, 1
    %s1137 = sshll.u32 %s1136, 4
    %1138 = dma.done [#allocation3], %s1137
    %v1139 = vld [vmem:[#allocation2] sm:$0xff]
    %v1140 = vld [vmem:[#allocation2 + $0x8] sm:$0xff]
    %v1141 = vld [vmem:[#allocation2 + $0x10] sm:$0xff]
    %v1142 = vld [vmem:[#allocation2 + $0x18] sm:$0xff]
    %v1143 = vld [vmem:[#allocation2 + $0x20] sm:$0xff]
    %v1144 = vld [vmem:[#allocation2 + $0x28] sm:$0xff]
    %v1145 = vld [vmem:[#allocation2 + $0x30] sm:$0xff]
    %v1146 = vld [vmem:[#allocation2 + $0x38] sm:$0xff]
    %v1147 = vld [vmem:[#allocation2 + $0x40] sm:$0xff]
    %v1148 = vld [vmem:[#allocation2 + $0x48] sm:$0xff]
    %v1149 = vld [vmem:[#allocation2 + $0x50] sm:$0xff]
    %v1150 = vld [vmem:[#allocation2 + $0x58] sm:$0xff]
    %v1151 = vld [vmem:[#allocation2 + $0x60] sm:$0xff]
    %v1152 = vld [vmem:[#allocation2 + $0x68] sm:$0xff]
    %v1153 = vld [vmem:[#allocation2 + $0x70] sm:$0xff]
    %v1154 = vld [vmem:[#allocation2 + $0x78] sm:$0xff]
    %v1155 = vld [vmem:[#allocation2 + $0x80] sm:$0xff]
    %v1156 = vld [vmem:[#allocation2 + $0x88] sm:$0xff]
    %v1157 = vld [vmem:[#allocation2 + $0x90] sm:$0xff]
    %v1158 = vld [vmem:[#allocation2 + $0x98] sm:$0xff]
    %v1159 = vld [vmem:[#allocation2 + $0xa0] sm:$0xff]
    %v1160 = vld [vmem:[#allocation2 + $0xa8] sm:$0xff]
    %v1161 = vld [vmem:[#allocation2 + $0xb0] sm:$0xff]
    %v1162 = vld [vmem:[#allocation2 + $0xb8] sm:$0xff]
    %v1163 = vld [vmem:[#allocation2 + $0xc0] sm:$0xff]
    %v1164 = vld [vmem:[#allocation2 + $0xc8] sm:$0xff]
    %v1165 = vld [vmem:[#allocation2 + $0xd0] sm:$0xff]
    %v1166 = vld [vmem:[#allocation2 + $0xd8] sm:$0xff]
    %v1167 = vld [vmem:[#allocation2 + $0xe0] sm:$0xff]
    %v1168 = vld [vmem:[#allocation2 + $0xe8] sm:$0xff]
    %v1169 = vld [vmem:[#allocation2 + $0xf0] sm:$0xff]
    %v1170 = vld [vmem:[#allocation2 + $0xf8] sm:$0xff]
    %v1171 = vld [vmem:[%s6] sm:$0x1]
    %v1173 = vlaneseq
    %v1174 = vshrl.u32 %v1173, 7
    %v1175 = vsub.s32 0, %v1174
    %v1176 = vrot.slane %v1171, %v1175
    %1178 = vmatprep.subr.mxu0 0.0
    %1179 = vmatpush1.msra.mxu0 %v1139
    %1180 = vmatprep.subr.mxu0 0.0
    %1181 = vmatpush1.msra.mxu0 %v1140
    %1182 = vmatprep.subr.mxu0 0.0
    %1183 = vmatpush1.msra.mxu0 %v1141
    %1184 = vmatprep.subr.mxu0 0.0
    %1185 = vmatpush1.msra.mxu0 %v1142
    %1186 = vmatprep.subr.mxu0 0.0
    %1187 = vmatpush1.msra.mxu0 %v1143
    %1188 = vmatprep.subr.mxu0 0.0
    %1189 = vmatpush1.msra.mxu0 %v1144
    %1190 = vmatprep.subr.mxu0 0.0
    %1191 = vmatpush1.msra.mxu0 %v1145
    %1192 = vmatprep.subr.mxu0 0.0
    %1193 = vmatpush1.msra.mxu0 %v1146
    %1194 = vmatprep.subr.mxu0 0.0
    %1195 = vmatpush1.msra.mxu0 %v1147
    %1196 = vmatprep.subr.mxu0 0.0
    %1197 = vmatpush1.msra.mxu0 %v1148
    %1198 = vmatprep.subr.mxu0 0.0
    %1199 = vmatpush1.msra.mxu0 %v1149
    %1200 = vmatprep.subr.mxu0 0.0
    %1201 = vmatpush1.msra.mxu0 %v1150
    %1202 = vmatprep.subr.mxu0 0.0
    %1203 = vmatpush1.msra.mxu0 %v1151
    %1204 = vmatprep.subr.mxu0 0.0
    %1205 = vmatpush1.msra.mxu0 %v1152
    %1206 = vmatprep.subr.mxu0 0.0
    %1207 = vmatpush1.msra.mxu0 %v1153
    %1208 = vmatprep.subr.mxu0 0.0
    %1209 = vmatpush1.msra.mxu0 %v1154
    %1210 = vmatprep.subr.mxu0 0.0
    %1211 = vmatpush1.msra.mxu0 %v1155
    %1212 = vmatprep.subr.mxu0 0.0
    %1213 = vmatpush1.msra.mxu0 %v1156
    %1214 = vmatprep.subr.mxu0 0.0
    %1215 = vmatpush1.msra.mxu0 %v1157
    %1216 = vmatprep.subr.mxu0 0.0
    %1217 = vmatpush1.msra.mxu0 %v1158
    %1218 = vmatprep.subr.mxu0 0.0
    %1219 = vmatpush1.msra.mxu0 %v1159
    %1220 = vmatprep.subr.mxu0 0.0
    %1221 = vmatpush1.msra.mxu0 %v1160
    %1222 = vmatprep.subr.mxu0 0.0
    %1223 = vmatpush1.msra.mxu0 %v1161
    %1224 = vmatprep.subr.mxu0 0.0
    %1225 = vmatpush1.msra.mxu0 %v1162
    %1226 = vmatprep.subr.mxu0 0.0
    %1227 = vmatpush1.msra.mxu0 %v1163
    %1228 = vmatprep.subr.mxu0 0.0
    %1229 = vmatpush1.msra.mxu0 %v1164
    %1230 = vmatprep.subr.mxu0 0.0
    %1231 = vmatpush1.msra.mxu0 %v1165
    %1232 = vmatprep.subr.mxu0 0.0
    %1233 = vmatpush1.msra.mxu0 %v1166
    %1234 = vmatprep.subr.mxu0 0.0
    %1235 = vmatpush1.msra.mxu0 %v1167
    %1236 = vmatprep.subr.mxu0 0.0
    %1237 = vmatpush1.msra.mxu0 %v1168
    %1238 = vmatprep.subr.mxu0 0.0
    %1239 = vmatpush1.msra.mxu0 %v1169
    %1240 = vmatprep.subr.mxu0 0.0
    %1241 = vmatpush1.msra.mxu0 %v1170
    %1242 = vmatprep.mubr.f32.mxu0 %v1121
    %1243 = vmatmul.mubr.f32.gmra.mrb[0].mxu0 %v1120
    %v1244 = vpop.f32.mrb[0].mxu0
    %v1245 = vadd.f32 %v1176, %v1244
    %v1246 = vpop.f32.mrb[0].mxu0
    %1247 = vmatprep.mubr.f32.mxu0 %v1135
    %1248 = vmatmul.mubr.f32.gmra.mrb[0].mxu0 %v1134
    %v1249 = vpop.f32.mrb[0].mxu0
    %v1250 = vadd.f32 %v1176, %v1249
    %v1251 = vpop.f32.mrb[0].mxu0
    %1252 = vdwg.mxu0
    %1253 = vst [vmem:[#allocation12] sm:$0xff] %v1245
    %1254 = vst [vmem:[#allocation12 + $0x8] sm:$0xff] %v1250
    // Predicated region
    $region46: #{tpu_custom_call.1} parent=1 // pred_check
      _
    $region47: #{tpu_custom_call.1} parent=1 // pred_check_branch
      %1256 = sbr.rel (0) target = $region49
    $region48: #{tpu_custom_call.1} parent=1 // pred_region
      %s1258 = ssub.s32 256, 256
      %1259 = vsyncadd [#allocation6], %s1258
      %s1260 = sshll.u32 [#allocation12], 4
      %s1261 = int_to_ptr.vmem [resolvable:$true] %s1260
      %1266 = dma.vmem_to_hbm [thread:$0]  %s1261, 256, %s7, [#allocation6], 128, 128, 8
    $region49: #{tpu_custom_call.1} parent=1 // pred_fallthru
      _
    // Predicated region
    $region50: #{tpu_custom_call.1} parent=1 // pred_check
      _
    $region51: #{tpu_custom_call.1} parent=1 // pred_check_branch
      %1268 = sbr.rel (0) target = $region53
    $region52: #{tpu_custom_call.1} parent=1 // pred_region
      %1269 = dma.done [#allocation6], 256
    $region53: #{tpu_custom_call.1} parent=1 // pred_fallthru
      _
    %1270 = vsyncpa [#allocation5], 1
    %1271 = vsyncpa [#allocation10], 1
    %1272 = vsyncpa [#allocation6], 1
    %1273 = vsyncpa [#allocation7], 1
  %1274 = vsyncmov [#allocation3]
  %s1275 = vpop.sfrf %1274
  %p1276 = scmp.eq.s32.totalorder %s1275, 0
  %p1277 = pneg %p1276
  %1279 = shalt.err (%p1277)

</llo_original>
